<compile_context>
chip_gen: v5e
topology: v5e:2x2
jax: 0.10.0
libtpu: 0.0.40
codegen_flags: <defaults>
</compile_context>

<pallas_src>
import jax
import jax.numpy as jnp
from jax.experimental import pallas as pl
from jax.experimental.pallas import tpu as pltpu


CPAD = 128  # channel padding -> 128-lane axis


# -----------------------------------------------------------------------------
# Fused Conv2D + folded-BN + LeakyReLU (+ optional residual add, + optional YOLO
# decode) Pallas kernel.  Channels are pre-padded to CPAD=128.
# -----------------------------------------------------------------------------
def conv_block(x, w_bf16, scale, bias, *, stride=1, leaky=True,
               residual=None, decode=None, target_rows=128):
    """x: (N,H,W,CPAD) f32.  w_bf16: (KH,KW,CPAD,CPAD) bf16 (zero-padded).
    scale/bias: (1,CPAD) f32 (zero in padded lanes).  residual: optional
    (N,Hout,Wout,CPAD) f32 added after the activation.  decode: optional dict
    {'kidx','aw','ah' (1,CPAD), 'stride_px' float} -> fused YOLO head decode."""
    N, H, W, C = x.shape
    assert C == CPAD
    KH, KW = int(w_bf16.shape[0]), int(w_bf16.shape[1])
    pad = (KH - 1) // 2  # darknet "same" padding for odd kernels
    xp = jnp.pad(x, ((0, 0), (pad, pad), (pad, pad), (0, 0)))
    Hp, Wp = H + 2 * pad, W + 2 * pad
    Hout = (Hp - KH) // stride + 1
    Wout = (Wp - KW) // stride + 1

    # Spatial row tiling: aim for ~target_rows output rows per grid step (MXU M dim).
    # At real YOLO resolutions this yields ~128-row tiles; per-step VMEM stays small
    # (well under the 32 MiB scoped default on all generations incl. v7x's 64 MiB).
    tile_h = Hout
    while tile_h % 2 == 0 and tile_h * Wout > target_rows:
        tile_h //= 2
    T = Hout // tile_h
    rows = tile_h * Wout
    in_rows = (tile_h - 1) * stride + KH  # input rows incl. halo for one tile

    has_res = residual is not None
    has_dec = decode is not None
    stride_px = float(decode["stride_px"]) if has_dec else None

    def kernel(*refs):
        x_ref, w_ref, s_ref, b_ref = refs[0:4]
        i = 4
        if has_res:
            r_ref = refs[i]; i += 1
        if has_dec:
            kidx_ref, aw_ref, ah_ref = refs[i:i + 3]; i += 3
        o_ref = refs[i]

        t = pl.program_id(1)
        in_base = t * (tile_h * stride)
        if (tile_h * stride) % 8 == 0:
            in_base = pl.multiple_of(in_base, 8)
        # Load this tile's input rows (incl. halo); static strided slicing per tap.
        xt = x_ref[0, pl.ds(in_base, in_rows), :, :]  # (in_rows, Wp, CPAD)

        acc = jnp.zeros((rows, CPAD), jnp.float32)
        # Static unrolled loop over the kernel window; each tap is a full-width
        # (rows,128)x(128,128) bf16 MXU matmul accumulated in f32.
        for dh in range(KH):
            for dw in range(KW):
                patch = xt[dh:dh + (tile_h - 1) * stride + 1:stride,
                           dw:dw + (Wout - 1) * stride + 1:stride, :]
                acc = acc + jnp.dot(
                    patch.reshape(rows, CPAD).astype(jnp.bfloat16),
                    w_ref[dh, dw],
                    preferred_element_type=jnp.float32)

        y = acc * s_ref[...] + b_ref[...]  # folded BN / bias (f32 epilogue, v5e-safe)
        if leaky:
            y = jnp.where(y > 0, y, 0.1 * y)  # LeakyReLU(0.1)
        y = y.reshape(tile_h, Wout, CPAD)
        if has_res:
            y = y + r_ref[0]  # fused residual shortcut
        if has_dec:
            # Fused YOLO decode on the VMEM-resident head tile (EUP work, free
            # under the MXU-bound conv).  Lanes are c = a*K + k; per-lane tables
            # supply k-index and anchor sizes, grid coords come from iota.
            kidx = kidx_ref[...].reshape(1, 1, CPAD)
            aw = aw_ref[...].reshape(1, 1, CPAD)
            ah = ah_ref[...].reshape(1, 1, CPAD)
            gy0 = (t * tile_h).astype(jnp.float32)
            gx = jax.lax.broadcasted_iota(jnp.float32, (tile_h, Wout, CPAD), 1)
            gy = jax.lax.broadcasted_iota(jnp.float32, (tile_h, Wout, CPAD), 0) + gy0
            sig = jax.nn.sigmoid(y)
            ex = jnp.exp(jnp.clip(y, -15.0, 15.0))  # clamp tw/th: no inf overflow
            y = jnp.where(kidx == 0, (sig + gx) * stride_px,
                jnp.where(kidx == 1, (sig + gy) * stride_px,
                jnp.where(kidx == 2, ex * aw,
                jnp.where(kidx == 3, ex * ah, sig))))
        o_ref[...] = y.reshape(1, tile_h, Wout, CPAD)  # lane-dense store (last dim 128)

    in_arrays = [xp, w_bf16, scale, bias]
    in_specs = [
        # Whole padded image per batch element; block index constant across the
        # row-tile axis so it is only DMA'd when n changes.
        pl.BlockSpec((1, Hp, Wp, CPAD), lambda n, t: (n, 0, 0, 0)),
        pl.BlockSpec((KH, KW, CPAD, CPAD), lambda n, t: (0, 0, 0, 0)),
        pl.BlockSpec((1, CPAD), lambda n, t: (0, 0)),
        pl.BlockSpec((1, CPAD), lambda n, t: (0, 0)),
    ]
    if has_res:
        in_arrays.append(residual)
        in_specs.append(pl.BlockSpec((1, tile_h, Wout, CPAD), lambda n, t: (n, t, 0, 0)))
    if has_dec:
        in_arrays += [decode["kidx"], decode["aw"], decode["ah"]]
        in_specs += [pl.BlockSpec((1, CPAD), lambda n, t: (0, 0)) for _ in range(3)]

    out = pl.pallas_call(
        kernel,
        out_shape=jax.ShapeDtypeStruct((N, Hout, Wout, CPAD), jnp.float32),
        grid=(N, T),
        in_specs=in_specs,
        out_specs=pl.BlockSpec((1, tile_h, Wout, CPAD), lambda n, t: (n, t, 0, 0)),
        compiler_params=pltpu.CompilerParams(
            dimension_semantics=("parallel", "parallel")),
    )(*in_arrays)
    return out


# -----------------------------------------------------------------------------
# Deterministic parameter construction (synthetic weights, folded BN, 128-padded)
# -----------------------------------------------------------------------------
def _make_conv_params(key, kh, kw, cin, cout, with_bn=True):
    kw_, kg, kb, km, kv = jax.random.split(key, 5)
    w = jax.random.normal(kw_, (kh, kw, cin, cout), jnp.float32) * (0.1 / (kh * kw * cin) ** 0.5)
    if with_bn:
        gamma = jax.random.uniform(kg, (cout,), jnp.float32, 0.5, 1.5)
        beta = jax.random.normal(kb, (cout,), jnp.float32) * 0.1
        mean = jax.random.normal(km, (cout,), jnp.float32) * 0.1
        var = jax.random.uniform(kv, (cout,), jnp.float32, 0.5, 1.5)
        scale = gamma / jnp.sqrt(var + 1e-5)
        bias = beta - mean * scale
    else:
        scale = jnp.ones((cout,), jnp.float32)
        bias = jax.random.normal(kb, (cout,), jnp.float32) * 0.1
    # Pad channel dims to the 128-lane width (zeros keep padded lanes exactly 0).
    w_pad = jnp.zeros((kh, kw, CPAD, CPAD), jnp.float32).at[:, :, :cin, :cout].set(w)
    s_pad = jnp.zeros((1, CPAD), jnp.float32).at[0, :cout].set(scale)
    b_pad = jnp.zeros((1, CPAD), jnp.float32).at[0, :cout].set(bias)
    # Weights in bf16 (halves weight DMA, full-rate MXU); accumulation stays f32.
    return w_pad.astype(jnp.bfloat16), s_pad, b_pad


class MiniYOLOv3:
    """Darknet-style mini backbone + residual block + YOLO detection head."""

    def __init__(self, key, in_ch=3, num_classes=4, num_anchors=3, img_size=16):
        self.num_classes = num_classes
        self.num_anchors = num_anchors
        self.img_size = img_size
        k1, k2, k3, k4, k5, ka = jax.random.split(key, 6)
        self.p1 = _make_conv_params(k1, 3, 3, in_ch, 16)          # stride 1
        self.p2 = _make_conv_params(k2, 3, 3, 16, 32)             # stride 2 (downsample)
        self.p3 = _make_conv_params(k3, 1, 1, 32, 16)             # residual bottleneck
        self.p4 = _make_conv_params(k4, 3, 3, 16, 32)
        head_c = num_anchors * (5 + num_classes)
        self.p5 = _make_conv_params(k5, 1, 1, 32, head_c, with_bn=False)  # linear head
        # anchors in input-pixel units
        self.anchors = jax.random.uniform(ka, (num_anchors, 2), jnp.float32, 2.0, 8.0)
        # Per-lane decode tables: lane c = a*(5+nc) + k
        K = 5 + num_classes
        lane = jnp.arange(CPAD)
        a_of_lane = jnp.clip(lane // K, 0, num_anchors - 1)
        k_of_lane = lane % K
        valid = lane < num_anchors * K
        self.kidx = jnp.where(valid, k_of_lane, K).astype(jnp.int32).reshape(1, CPAD)
        self.aw_lane = jnp.where(valid, self.anchors[a_of_lane, 0], 0.0
                                 ).astype(jnp.float32).reshape(1, CPAD)
        self.ah_lane = jnp.where(valid, self.anchors[a_of_lane, 1], 0.0
                                 ).astype(jnp.float32).reshape(1, CPAD)

    def __call__(self, x_nchw):
        # layout: NCHW in (PyTorch), NHWC + 128-padded channels inside all kernels.
        x = jnp.transpose(x_nchw.astype(jnp.float32), (0, 2, 3, 1))
        N, H, W, Cin = x.shape
        x = jnp.pad(x, ((0, 0), (0, 0), (0, 0), (0, CPAD - Cin)))

        x = conv_block(x, *self.p1, stride=1, leaky=True)
        x = conv_block(x, *self.p2, stride=2, leaky=True)
        r = x
        x = conv_block(x, *self.p3, stride=1, leaky=True)
        x = conv_block(x, *self.p4, stride=1, leaky=True, residual=r)  # fused shortcut

        feat_h = x.shape[1]
        stride_px = float(self.img_size) / float(feat_h)
        decoded = conv_block(
            x, *self.p5, stride=1, leaky=False,
            decode=dict(kidx=self.kidx, aw=self.aw_lane, ah=self.ah_lane,
                        stride_px=stride_px))  # fused YOLO head decode

        # Reorder decoded slab to the PyTorch (N, A*H*W, 5+nc) convention (glue).
        A, K = self.num_anchors, 5 + self.num_classes
        Hout, Wout = decoded.shape[1], decoded.shape[2]
        d = decoded[..., :A * K].reshape(N, Hout, Wout, A, K)
        d = jnp.transpose(d, (0, 3, 1, 2, 4)).reshape(N, A * Hout * Wout, K)
        return d


if __name__ == "__main__":
    key = jax.random.PRNGKey(0)
    kmodel, kdata = jax.random.split(key)
    # Small stand-in for the 416x416 RGB input required by the original module.
    N, C, H, W = 2, 3, 16, 16
    x = jax.random.normal(kdata, (N, C, H, W), jnp.float32)

    model = MiniYOLOv3(kmodel, in_ch=C, num_classes=4, num_anchors=3, img_size=H)
    out = jax.block_until_ready(model(x))
    assert out.shape == (N, 3 * (H // 2) * (W // 2), 5 + 4)
    assert bool(jnp.all(jnp.isfinite(out)))
    print("KERNEL_OK")
</pallas_src>

<mosaic_0001>
module attributes {stable_mosaic.version = 11 : i64} {
  func.func @kernel(%arg0: i32, %arg1: i32, %arg2: memref<1x18x18x128xf32, #tpu.memory_space<vmem>>, %arg3: memref<3x3x128x128xbf16, #tpu.memory_space<vmem>>, %arg4: memref<1x128xf32, #tpu.memory_space<vmem>>, %arg5: memref<1x128xf32, #tpu.memory_space<vmem>>, %arg6: memref<1x8x16x128xf32, #tpu.memory_space<vmem>>) attributes {dimension_semantics = [#tpu.dimension_semantics<parallel>, #tpu.dimension_semantics<parallel>], iteration_bounds = array<i64: 2, 2>, scalar_prefetch = 0 : i64, scratch_operands = 0 : i64, tpu.core_type = #tpu.core_type<tc>, window_params = [{transform_indices = @transform_0, window_bounds = array<i64: 1, 18, 18, 128>}, {pipeline_mode = #tpu.pipeline_mode<synchronous>, transform_indices = @transform_1, window_bounds = array<i64: 3, 3, 128, 128>}, {pipeline_mode = #tpu.pipeline_mode<synchronous>, transform_indices = @transform_2, window_bounds = array<i64: 1, 128>}, {pipeline_mode = #tpu.pipeline_mode<synchronous>, transform_indices = @transform_3, window_bounds = array<i64: 1, 128>}, {transform_indices = @transform_4, window_bounds = array<i64: 1, 8, 16, 128>}]} {
    %c8_i32 = arith.constant 8 : i32
    %0 = arith.muli %arg1, %c8_i32 : i32
    %1 = tpu.assume_multiple %0, 8 : i32
    %c0 = arith.constant 0 : index
    %2 = arith.index_cast %1 : i32 to index
    %c0_0 = arith.constant 0 : index
    %c0_1 = arith.constant 0 : index
    %3 = vector.load %arg2[%c0, %2, %c0_0, %c0_1] : memref<1x18x18x128xf32, #tpu.memory_space<vmem>>, vector<1x10x18x128xf32>
    %4 = vector.shape_cast %3 : vector<1x10x18x128xf32> to vector<10x18x128xf32>
    %cst = arith.constant 0.000000e+00 : f32
    %5 = vector.broadcast %cst : f32 to vector<128x128xf32>
    %6 = vector.extract_strided_slice %4 {offsets = [0, 0, 0], sizes = [8, 16, 128], strides = [1, 1, 1]} : vector<10x18x128xf32> to vector<8x16x128xf32>
    %7 = vector.shape_cast %6 : vector<8x16x128xf32> to vector<128x128xf32>
    %8 = arith.truncf %7 : vector<128x128xf32> to vector<128x128xbf16>
    %c0_2 = arith.constant 0 : index
    %c0_3 = arith.constant 0 : index
    %c0_4 = arith.constant 0 : index
    %c0_5 = arith.constant 0 : index
    %9 = vector.load %arg3[%c0_2, %c0_3, %c0_4, %c0_5] : memref<3x3x128x128xbf16, #tpu.memory_space<vmem>>, vector<1x1x128x128xbf16>
    %10 = vector.shape_cast %9 : vector<1x1x128x128xbf16> to vector<128x128xbf16>
    %cst_6 = arith.constant dense<0.000000e+00> : vector<128x128xf32>
    %11 = tpu.matmul %8, %10, %cst_6 {dimension_numbers = #tpu.dot_dimension_numbers<[1], [0], [0], [1], [0, 0, 1, 1], [], []>} : vector<128x128xbf16>, vector<128x128xbf16>, vector<128x128xf32> -> vector<128x128xf32>
    %12 = arith.addf %5, %11 : vector<128x128xf32>
    %13 = vector.extract_strided_slice %4 {offsets = [0, 1, 0], sizes = [8, 16, 128], strides = [1, 1, 1]} : vector<10x18x128xf32> to vector<8x16x128xf32>
    %14 = vector.shape_cast %13 : vector<8x16x128xf32> to vector<128x128xf32>
    %15 = arith.truncf %14 : vector<128x128xf32> to vector<128x128xbf16>
    %c0_7 = arith.constant 0 : index
    %c1 = arith.constant 1 : index
    %c0_8 = arith.constant 0 : index
    %c0_9 = arith.constant 0 : index
    %16 = vector.load %arg3[%c0_7, %c1, %c0_8, %c0_9] : memref<3x3x128x128xbf16, #tpu.memory_space<vmem>>, vector<1x1x128x128xbf16>
    %17 = vector.shape_cast %16 : vector<1x1x128x128xbf16> to vector<128x128xbf16>
    %cst_10 = arith.constant dense<0.000000e+00> : vector<128x128xf32>
    %18 = tpu.matmul %15, %17, %cst_10 {dimension_numbers = #tpu.dot_dimension_numbers<[1], [0], [0], [1], [0, 0, 1, 1], [], []>} : vector<128x128xbf16>, vector<128x128xbf16>, vector<128x128xf32> -> vector<128x128xf32>
    %19 = arith.addf %12, %18 : vector<128x128xf32>
    %20 = vector.extract_strided_slice %4 {offsets = [0, 2, 0], sizes = [8, 16, 128], strides = [1, 1, 1]} : vector<10x18x128xf32> to vector<8x16x128xf32>
    %21 = vector.shape_cast %20 : vector<8x16x128xf32> to vector<128x128xf32>
    %22 = arith.truncf %21 : vector<128x128xf32> to vector<128x128xbf16>
    %c0_11 = arith.constant 0 : index
    %c2 = arith.constant 2 : index
    %c0_12 = arith.constant 0 : index
    %c0_13 = arith.constant 0 : index
    %23 = vector.load %arg3[%c0_11, %c2, %c0_12, %c0_13] : memref<3x3x128x128xbf16, #tpu.memory_space<vmem>>, vector<1x1x128x128xbf16>
    %24 = vector.shape_cast %23 : vector<1x1x128x128xbf16> to vector<128x128xbf16>
    %cst_14 = arith.constant dense<0.000000e+00> : vector<128x128xf32>
    %25 = tpu.matmul %22, %24, %cst_14 {dimension_numbers = #tpu.dot_dimension_numbers<[1], [0], [0], [1], [0, 0, 1, 1], [], []>} : vector<128x128xbf16>, vector<128x128xbf16>, vector<128x128xf32> -> vector<128x128xf32>
    %26 = arith.addf %19, %25 : vector<128x128xf32>
    %27 = vector.extract_strided_slice %4 {offsets = [1, 0, 0], sizes = [8, 16, 128], strides = [1, 1, 1]} : vector<10x18x128xf32> to vector<8x16x128xf32>
    %28 = vector.shape_cast %27 : vector<8x16x128xf32> to vector<128x128xf32>
    %29 = arith.truncf %28 : vector<128x128xf32> to vector<128x128xbf16>
    %c1_15 = arith.constant 1 : index
    %c0_16 = arith.constant 0 : index
    %c0_17 = arith.constant 0 : index
    %c0_18 = arith.constant 0 : index
    %30 = vector.load %arg3[%c1_15, %c0_16, %c0_17, %c0_18] : memref<3x3x128x128xbf16, #tpu.memory_space<vmem>>, vector<1x1x128x128xbf16>
    %31 = vector.shape_cast %30 : vector<1x1x128x128xbf16> to vector<128x128xbf16>
    %cst_19 = arith.constant dense<0.000000e+00> : vector<128x128xf32>
    %32 = tpu.matmul %29, %31, %cst_19 {dimension_numbers = #tpu.dot_dimension_numbers<[1], [0], [0], [1], [0, 0, 1, 1], [], []>} : vector<128x128xbf16>, vector<128x128xbf16>, vector<128x128xf32> -> vector<128x128xf32>
    %33 = arith.addf %26, %32 : vector<128x128xf32>
    %34 = vector.extract_strided_slice %4 {offsets = [1, 1, 0], sizes = [8, 16, 128], strides = [1, 1, 1]} : vector<10x18x128xf32> to vector<8x16x128xf32>
    %35 = vector.shape_cast %34 : vector<8x16x128xf32> to vector<128x128xf32>
    %36 = arith.truncf %35 : vector<128x128xf32> to vector<128x128xbf16>
    %c1_20 = arith.constant 1 : index
    %c1_21 = arith.constant 1 : index
    %c0_22 = arith.constant 0 : index
    %c0_23 = arith.constant 0 : index
    %37 = vector.load %arg3[%c1_20, %c1_21, %c0_22, %c0_23] : memref<3x3x128x128xbf16, #tpu.memory_space<vmem>>, vector<1x1x128x128xbf16>
    %38 = vector.shape_cast %37 : vector<1x1x128x128xbf16> to vector<128x128xbf16>
    %cst_24 = arith.constant dense<0.000000e+00> : vector<128x128xf32>
    %39 = tpu.matmul %36, %38, %cst_24 {dimension_numbers = #tpu.dot_dimension_numbers<[1], [0], [0], [1], [0, 0, 1, 1], [], []>} : vector<128x128xbf16>, vector<128x128xbf16>, vector<128x128xf32> -> vector<128x128xf32>
    %40 = arith.addf %33, %39 : vector<128x128xf32>
    %41 = vector.extract_strided_slice %4 {offsets = [1, 2, 0], sizes = [8, 16, 128], strides = [1, 1, 1]} : vector<10x18x128xf32> to vector<8x16x128xf32>
    %42 = vector.shape_cast %41 : vector<8x16x128xf32> to vector<128x128xf32>
    %43 = arith.truncf %42 : vector<128x128xf32> to vector<128x128xbf16>
    %c1_25 = arith.constant 1 : index
    %c2_26 = arith.constant 2 : index
    %c0_27 = arith.constant 0 : index
    %c0_28 = arith.constant 0 : index
    %44 = vector.load %arg3[%c1_25, %c2_26, %c0_27, %c0_28] : memref<3x3x128x128xbf16, #tpu.memory_space<vmem>>, vector<1x1x128x128xbf16>
    %45 = vector.shape_cast %44 : vector<1x1x128x128xbf16> to vector<128x128xbf16>
    %cst_29 = arith.constant dense<0.000000e+00> : vector<128x128xf32>
    %46 = tpu.matmul %43, %45, %cst_29 {dimension_numbers = #tpu.dot_dimension_numbers<[1], [0], [0], [1], [0, 0, 1, 1], [], []>} : vector<128x128xbf16>, vector<128x128xbf16>, vector<128x128xf32> -> vector<128x128xf32>
    %47 = arith.addf %40, %46 : vector<128x128xf32>
    %48 = vector.extract_strided_slice %4 {offsets = [2, 0, 0], sizes = [8, 16, 128], strides = [1, 1, 1]} : vector<10x18x128xf32> to vector<8x16x128xf32>
    %49 = vector.shape_cast %48 : vector<8x16x128xf32> to vector<128x128xf32>
    %50 = arith.truncf %49 : vector<128x128xf32> to vector<128x128xbf16>
    %c2_30 = arith.constant 2 : index
    %c0_31 = arith.constant 0 : index
    %c0_32 = arith.constant 0 : index
    %c0_33 = arith.constant 0 : index
    %51 = vector.load %arg3[%c2_30, %c0_31, %c0_32, %c0_33] : memref<3x3x128x128xbf16, #tpu.memory_space<vmem>>, vector<1x1x128x128xbf16>
    %52 = vector.shape_cast %51 : vector<1x1x128x128xbf16> to vector<128x128xbf16>
    %cst_34 = arith.constant dense<0.000000e+00> : vector<128x128xf32>
    %53 = tpu.matmul %50, %52, %cst_34 {dimension_numbers = #tpu.dot_dimension_numbers<[1], [0], [0], [1], [0, 0, 1, 1], [], []>} : vector<128x128xbf16>, vector<128x128xbf16>, vector<128x128xf32> -> vector<128x128xf32>
    %54 = arith.addf %47, %53 : vector<128x128xf32>
    %55 = vector.extract_strided_slice %4 {offsets = [2, 1, 0], sizes = [8, 16, 128], strides = [1, 1, 1]} : vector<10x18x128xf32> to vector<8x16x128xf32>
    %56 = vector.shape_cast %55 : vector<8x16x128xf32> to vector<128x128xf32>
    %57 = arith.truncf %56 : vector<128x128xf32> to vector<128x128xbf16>
    %c2_35 = arith.constant 2 : index
    %c1_36 = arith.constant 1 : index
    %c0_37 = arith.constant 0 : index
    %c0_38 = arith.constant 0 : index
    %58 = vector.load %arg3[%c2_35, %c1_36, %c0_37, %c0_38] : memref<3x3x128x128xbf16, #tpu.memory_space<vmem>>, vector<1x1x128x128xbf16>
    %59 = vector.shape_cast %58 : vector<1x1x128x128xbf16> to vector<128x128xbf16>
    %cst_39 = arith.constant dense<0.000000e+00> : vector<128x128xf32>
    %60 = tpu.matmul %57, %59, %cst_39 {dimension_numbers = #tpu.dot_dimension_numbers<[1], [0], [0], [1], [0, 0, 1, 1], [], []>} : vector<128x128xbf16>, vector<128x128xbf16>, vector<128x128xf32> -> vector<128x128xf32>
    %61 = arith.addf %54, %60 : vector<128x128xf32>
    %62 = vector.extract_strided_slice %4 {offsets = [2, 2, 0], sizes = [8, 16, 128], strides = [1, 1, 1]} : vector<10x18x128xf32> to vector<8x16x128xf32>
    %63 = vector.shape_cast %62 : vector<8x16x128xf32> to vector<128x128xf32>
    %64 = arith.truncf %63 : vector<128x128xf32> to vector<128x128xbf16>
    %c2_40 = arith.constant 2 : index
    %c2_41 = arith.constant 2 : index
    %c0_42 = arith.constant 0 : index
    %c0_43 = arith.constant 0 : index
    %65 = vector.load %arg3[%c2_40, %c2_41, %c0_42, %c0_43] : memref<3x3x128x128xbf16, #tpu.memory_space<vmem>>, vector<1x1x128x128xbf16>
    %66 = vector.shape_cast %65 : vector<1x1x128x128xbf16> to vector<128x128xbf16>
    %cst_44 = arith.constant dense<0.000000e+00> : vector<128x128xf32>
    %67 = tpu.matmul %64, %66, %cst_44 {dimension_numbers = #tpu.dot_dimension_numbers<[1], [0], [0], [1], [0, 0, 1, 1], [], []>} : vector<128x128xbf16>, vector<128x128xbf16>, vector<128x128xf32> -> vector<128x128xf32>
    %68 = arith.addf %61, %67 : vector<128x128xf32>
    %c0_45 = arith.constant 0 : index
    %c0_46 = arith.constant 0 : index
    %69 = vector.load %arg4[%c0_45, %c0_46] : memref<1x128xf32, #tpu.memory_space<vmem>>, vector<1x128xf32>
    %70 = vector.broadcast %69 : vector<1x128xf32> to vector<128x128xf32>
    %71 = arith.mulf %68, %70 : vector<128x128xf32>
    %c0_47 = arith.constant 0 : index
    %c0_48 = arith.constant 0 : index
    %72 = vector.load %arg5[%c0_47, %c0_48] : memref<1x128xf32, #tpu.memory_space<vmem>>, vector<1x128xf32>
    %73 = vector.broadcast %72 : vector<1x128xf32> to vector<128x128xf32>
    %74 = arith.addf %71, %73 : vector<128x128xf32>
    %cst_49 = arith.constant 0.000000e+00 : f32
    %75 = vector.broadcast %cst_49 : f32 to vector<128x128xf32>
    %76 = arith.cmpf ogt, %74, %75 : vector<128x128xf32>
    %cst_50 = arith.constant 1.000000e-01 : f32
    %77 = vector.broadcast %cst_50 : f32 to vector<128x128xf32>
    %78 = arith.mulf %77, %74 : vector<128x128xf32>
    %79 = arith.select %76, %74, %78 : vector<128x128xi1>, vector<128x128xf32>
    %80 = vector.shape_cast %79 : vector<128x128xf32> to vector<8x16x128xf32>
    %81 = vector.shape_cast %80 : vector<8x16x128xf32> to vector<1x8x16x128xf32>
    %c0_51 = arith.constant 0 : index
    %c0_52 = arith.constant 0 : index
    %c0_53 = arith.constant 0 : index
    %c0_54 = arith.constant 0 : index
    %82 = vector.load %arg6[%c0_51, %c0_52, %c0_53, %c0_54] : memref<1x8x16x128xf32, #tpu.memory_space<vmem>>, vector<1x8x16x128xf32>
    tpu.vector_store %arg6[%c0_51, %c0_52, %c0_53, %c0_54], %81 {strides = array<i32>} : memref<1x8x16x128xf32, #tpu.memory_space<vmem>>, vector<1x8x16x128xf32>,
    return
  }
  func.func @transform_0(%arg0: i32, %arg1: i32) -> (i32, i32, i32, i32) {
    %c0_i32 = arith.constant 0 : i32
    %c0_i32_0 = arith.constant 0 : i32
    %c0_i32_1 = arith.constant 0 : i32
    %c0_i32_2 = arith.constant 0 : i32
    return %arg0, %c0_i32, %c0_i32_0, %c0_i32_1 : i32, i32, i32, i32
  }
  func.func @transform_1(%arg0: i32, %arg1: i32) -> (i32, i32, i32, i32) {
    %c0_i32 = arith.constant 0 : i32
    %c0_i32_0 = arith.constant 0 : i32
    %c0_i32_1 = arith.constant 0 : i32
    %c0_i32_2 = arith.constant 0 : i32
    %c0_i32_3 = arith.constant 0 : i32
    return %c0_i32, %c0_i32_0, %c0_i32_1, %c0_i32_2 : i32, i32, i32, i32
  }
  func.func @transform_2(%arg0: i32, %arg1: i32) -> (i32, i32) {
    %c0_i32 = arith.constant 0 : i32
    %c0_i32_0 = arith.constant 0 : i32
    %c0_i32_1 = arith.constant 0 : i32
    return %c0_i32, %c0_i32_0 : i32, i32
  }
  func.func @transform_3(%arg0: i32, %arg1: i32) -> (i32, i32) {
    %c0_i32 = arith.constant 0 : i32
    %c0_i32_0 = arith.constant 0 : i32
    %c0_i32_1 = arith.constant 0 : i32
    return %c0_i32, %c0_i32_0 : i32, i32
  }
  func.func @transform_4(%arg0: i32, %arg1: i32) -> (i32, i32, i32, i32) {
    %c0_i32 = arith.constant 0 : i32
    %c0_i32_0 = arith.constant 0 : i32
    %c0_i32_1 = arith.constant 0 : i32
    return %arg0, %arg1, %c0_i32, %c0_i32_0 : i32, i32, i32, i32
  }
}

</mosaic_0001>

<llo_original>
// kernel: tpu_custom_call.1
$region0: #{tpu_custom_call.1}
  #allocation0 [shape = 'u32[]', space=smem, size = 0x4, offset = 0x4, fixed_abs, tag = 'smem constant byte address 0x4 - core index']
  #allocation1 [shape = 'u32[72,128]{1,0:T(1,128)}', space=vmem, size = 0x9000, scoped, tag = 'internal scratch']
  %s0 = inlined_call_operand.vmem [shape: f32[2,18,18,128], index: 0, kind: input, shape index: {}]
  %s1 = inlined_call_operand.vmem [shape: bf16[3,3,128,128], index: 1, kind: input, shape index: {}]
  %s2 = inlined_call_operand.vmem [shape: f32[1,128], index: 2, kind: input, shape index: {}]
  %s3 = inlined_call_operand.vmem [shape: f32[1,128], index: 3, kind: input, shape index: {}]
  %s4 = inlined_call_operand.hbm [shape: f32[2,16,16,128], index: 4, kind: output, shape index: {}]
  %s5 = sld [smem:[#allocation0]]
  $region49: #{tpu_custom_call.1} parent=0
    _
  %s7 = ssub.s32 1, %s5
  %s8 = scalar_select 0, %s7, %s5
  $region1: #{tpu_custom_call.1} parent=0
    #allocation2 [shape = 'u8[131072]{0}', space=vmem, size = 0x20000, scoped, tag = 'output window, operand 0']
    #allocation3 [shape = 's32[2]{0}', space=sflag, size = 0x8, scoped, tag = 'scoped memory for tpu_custom_call.1']
    %9 = vsyncpa [#allocation3], 0
    %s10 = scalar_lea.sflag [#allocation3], 1
    %11 = vsyncpa %s10, 0
    loop: start=0, step=1, limit=6
    $region2: #{tpu_custom_call.1} parent=1 // loop_pre_header
      _
    $region3: #{tpu_custom_call.1} parent=1 // loop_header
      %s13 = sphi 0, %s17
      %p14 = scmp.ge.s32.totalorder %s13, 6
      %s20 = sphi 0, %s32
      %s21 = sphi 0, %s28
      %s22 = sphi 0, %s20
      %s23 = sphi 0, %s21
      %s24 = sphi 0, %s22
      %s25 = sphi 0, %s23
      %s35 = sphi 0, %s37
      %s38 = sphi 0, %s35
      %s39 = sphi 0, %s38
      %s55 = sphi 0, %s39
      %s59 = sphi 0, %s59
      %s61 = sphi 0, %s59
      %s62 = sphi 0, %s61
      %s76 = sphi 0, %s62
      %s80 = sphi 0, %s80
      %s82 = sphi 0, %s80
      %s83 = sphi 0, %s82
      %s97 = sphi 0, %s83
      %s101 = sphi 0, %s101
      %s103 = sphi 0, %s101
      %s104 = sphi 0, %s103
      %s118 = sphi 0, %s104
      %s126 = sphi 0, %s128
      %s129 = sphi 0, %s126
      %s130 = sphi 0, %s129
      %s146 = sphi 0, %s130
    $region4: #{tpu_custom_call.1} parent=1 // loop_header_branch
      %16 = sbr.rel (%p14) target = $region8
    $region5: #{tpu_custom_call.1} parent=1 // loop_body
      %s18 = ssub.s32 %s13, 1
      %s19 = ssub.s32 %s13, 2
      %s26 = sadd.s32 1, %s21
      %p27 = scmp.ge.s32.totalorder %s26, 2
      %s28 = scalar_select %p27, 0, %s26
      %s29 = sadd.s32 1, %s20
      %s30 = scalar_select %p27, %s29, %s20
      %p31 = scmp.ge.s32.totalorder %s30, 2
      %s32 = scalar_select %p31, 0, %s30
      %s33 = ssub.s32 %s20, %s32
      %p34 = scmp.eq.s32.totalorder %s33, 0
      %s36 = sadd.s32 %s35, 1
      %s37 = scalar_select %p34, %s35, %s36
      %p40 = pneg %p34
      %p41 = scmp.eq.s32.totalorder %s13, 3
      %p42 = por %p40, %p41
      %p43 = scmp.ne.s32.totalorder %s35, %s38
      %p44 = scmp.eq.s32.totalorder %s13, 0
      %p45 = por %p43, %p44
      %p46 = scmp.ne.s32.totalorder %s35, %s38
      %p47 = scmp.eq.s32.totalorder %s18, 3
      %p48 = por %p46, %p47
      %p49 = scmp.ne.s32.totalorder %s38, %s39
      %p50 = scmp.eq.s32.totalorder %s18, 0
      %p51 = por %p49, %p50
      %p52 = scmp.ne.s32.totalorder %s38, %s39
      %p53 = scmp.eq.s32.totalorder %s19, 3
      %p54 = por %p52, %p53
      %p56 = scmp.ne.s32.totalorder %s39, %s55
      %p57 = scmp.eq.s32.totalorder %s19, 0
      %p58 = por %p56, %p57
      %s60 = sadd.s32 %s59, 1
      %p63 = scmp.eq.s32.totalorder %s13, 3
      %p64 = scmp.ne.s32.totalorder %s59, %s61
      %p65 = scmp.eq.s32.totalorder %s13, 0
      %p66 = por %p64, %p65
      %p67 = scmp.ne.s32.totalorder %s59, %s61
      %p68 = scmp.eq.s32.totalorder %s18, 3
      %p69 = por %p67, %p68
      %p70 = scmp.ne.s32.totalorder %s61, %s62
      %p71 = scmp.eq.s32.totalorder %s18, 0
      %p72 = por %p70, %p71
      %p73 = scmp.ne.s32.totalorder %s61, %s62
      %p74 = scmp.eq.s32.totalorder %s19, 3
      %p75 = por %p73, %p74
      %p77 = scmp.ne.s32.totalorder %s62, %s76
      %p78 = scmp.eq.s32.totalorder %s19, 0
      %p79 = por %p77, %p78
      %s81 = sadd.s32 %s80, 1
      %p84 = scmp.eq.s32.totalorder %s13, 3
      %p85 = scmp.ne.s32.totalorder %s80, %s82
      %p86 = scmp.eq.s32.totalorder %s13, 0
      %p87 = por %p85, %p86
      %p88 = scmp.ne.s32.totalorder %s80, %s82
      %p89 = scmp.eq.s32.totalorder %s18, 3
      %p90 = por %p88, %p89
      %p91 = scmp.ne.s32.totalorder %s82, %s83
      %p92 = scmp.eq.s32.totalorder %s18, 0
      %p93 = por %p91, %p92
      %p94 = scmp.ne.s32.totalorder %s82, %s83
      %p95 = scmp.eq.s32.totalorder %s19, 3
      %p96 = por %p94, %p95
      %p98 = scmp.ne.s32.totalorder %s83, %s97
      %p99 = scmp.eq.s32.totalorder %s19, 0
      %p100 = por %p98, %p99
      %s102 = sadd.s32 %s101, 1
      %p105 = scmp.eq.s32.totalorder %s13, 3
      %p106 = scmp.ne.s32.totalorder %s101, %s103
      %p107 = scmp.eq.s32.totalorder %s13, 0
      %p108 = por %p106, %p107
      %p109 = scmp.ne.s32.totalorder %s101, %s103
      %p110 = scmp.eq.s32.totalorder %s18, 3
      %p111 = por %p109, %p110
      %p112 = scmp.ne.s32.totalorder %s103, %s104
      %p113 = scmp.eq.s32.totalorder %s18, 0
      %p114 = por %p112, %p113
      %p115 = scmp.ne.s32.totalorder %s103, %s104
      %p116 = scmp.eq.s32.totalorder %s19, 3
      %p117 = por %p115, %p116
      %p119 = scmp.ne.s32.totalorder %s104, %s118
      %p120 = scmp.eq.s32.totalorder %s19, 0
      %p121 = por %p119, %p120
      %s122 = ssub.s32 %s20, %s32
      %s123 = ssub.s32 %s21, %s28
      %s124 = sor.u32 %s122, %s123
      %p125 = scmp.eq.s32.totalorder %s124, 0
      %s127 = sadd.s32 %s126, 1
      %s128 = scalar_select %p125, %s126, %s127
      %p131 = pneg %p125
      %p132 = scmp.eq.s32.totalorder %s13, 3
      %p133 = por %p131, %p132
      %p134 = scmp.ne.s32.totalorder %s126, %s129
      %p135 = scmp.eq.s32.totalorder %s13, 0
      %p136 = por %p134, %p135
      %p137 = scmp.ne.s32.totalorder %s126, %s129
      %p138 = scmp.eq.s32.totalorder %s18, 3
      %p139 = por %p137, %p138
      %p140 = scmp.ne.s32.totalorder %s129, %s130
      %p141 = scmp.eq.s32.totalorder %s18, 0
      %p142 = por %p140, %p141
      %p143 = scmp.ne.s32.totalorder %s129, %s130
      %p144 = scmp.eq.s32.totalorder %s19, 3
      %p145 = por %p143, %p144
      %p147 = scmp.ne.s32.totalorder %s130, %s146
      %p148 = scmp.eq.s32.totalorder %s19, 0
      %p149 = por %p147, %p148
      %p150 = scmp.le.s32.totalorder 1, %s13
      %p151 = scmp.lt.s32.totalorder %s13, 5
      %p152 = pnand %p150, %p151
      %p153 = pneg %p152
      // Predicated region
      $region9: #{tpu_custom_call.1} parent=5 // pred_check
        _
      $region10: #{tpu_custom_call.1} parent=5 // pred_check_branch
        %155 = sbr.rel (%p152) target = $region12
      $region11: #{tpu_custom_call.1} parent=5 // pred_region
        %s156 = ssub.s32 %s13, 1
        // Predicated region
        $region13: #{tpu_custom_call.1} parent=11 // pred_check
          %p157 = pneg %p72
        $region14: #{tpu_custom_call.1} parent=11 // pred_check_branch
          %159 = sbr.rel (%p157) target = $region16
        $region15: #{tpu_custom_call.1} parent=11 // pred_region
          _
        $region16: #{tpu_custom_call.1} parent=11 // pred_fallthru
          _
        // Predicated region
        $region17: #{tpu_custom_call.1} parent=11 // pred_check
          %p160 = pneg %p93
        $region18: #{tpu_custom_call.1} parent=11 // pred_check_branch
          %162 = sbr.rel (%p160) target = $region20
        $region19: #{tpu_custom_call.1} parent=11 // pred_region
          _
        $region20: #{tpu_custom_call.1} parent=11 // pred_fallthru
          _
        // Predicated region
        $region21: #{tpu_custom_call.1} parent=11 // pred_check
          %p163 = pneg %p114
        $region22: #{tpu_custom_call.1} parent=11 // pred_check_branch
          %165 = sbr.rel (%p163) target = $region24
        $region23: #{tpu_custom_call.1} parent=11 // pred_region
          _
        $region24: #{tpu_custom_call.1} parent=11 // pred_fallthru
          _
      $region12: #{tpu_custom_call.1} parent=5 // pred_fallthru
        _
      %p166 = scmp.lt.s32.totalorder %s13, 4
      // Predicated region
      $region25: #{tpu_custom_call.1} parent=5 // pred_check
        %p167 = pneg %p166
      $region26: #{tpu_custom_call.1} parent=5 // pred_check_branch
        %169 = sbr.rel (%p167) target = $region28
      $region27: #{tpu_custom_call.1} parent=5 // pred_region
        // Predicated region
        $region29: #{tpu_custom_call.1} parent=27 // pred_check
          %p170 = pneg %p45
        $region30: #{tpu_custom_call.1} parent=27 // pred_check_branch
          %172 = sbr.rel (%p170) target = $region32
        $region31: #{tpu_custom_call.1} parent=27 // pred_region
          %p173 = scmp.lt.s32.totalorder %s20, 1
          %s174 = scalar_select %p173, %s20, 1
          %s175 = smul.addr %s174, 54
          %s176 = smul.addr %s175, 8
          %s177 = scalar_lea.vmem %s0, %s176
        $region32: #{tpu_custom_call.1} parent=27 // pred_fallthru
          _
      $region28: #{tpu_custom_call.1} parent=5 // pred_fallthru
        _
      %p178 = scmp.le.s32.totalorder 1, %s13
      %p179 = scmp.lt.s32.totalorder %s13, 5
      %p180 = pnand %p178, %p179
      %p181 = pneg %p180
      // Predicated region
      $region33: #{tpu_custom_call.1} parent=5 // pred_check
        _
      $region34: #{tpu_custom_call.1} parent=5 // pred_check_branch
        %183 = sbr.rel (%p180) target = $region36
      $region35: #{tpu_custom_call.1} parent=5 // pred_region
        %s184 = ssub.s32 %s13, 1
        %p185 = scmp.lt.s32.totalorder %s22, 1
        %s186 = scalar_select %p185, %s22, 1
        %s187 = smul.addr %s186, 54
        %s188 = smul.addr %s187, 8
        %s189 = scalar_lea.vmem %s0, %s188
        %p190 = pneg %p51
        %p191 = pneg %p48
        %p192 = pneg %p72
        %p193 = pneg %p69
        %p194 = pneg %p93
        %p195 = pneg %p90
        %p196 = pneg %p114
        %p197 = pneg %p111
        %p198 = pneg %p142
        %p199 = pneg %p139
        %s200 = sand.u32 %s129, 1
        %s201 = scalar_lea.sflag [#allocation3], %s200
        %s202 = sand.u32 %s129, 1
        %s203 = smul.addr %s202, 128
        %s204 = scalar_lea.vmem [#allocation2], %s203
        %p205 = scmp.lt.s32.totalorder %s22, 1
        %s206 = scalar_select %p205, %s22, 1
        %s207 = smul.addr %s206, 54
        %s208 = smul.addr %s207, 8
        %s209 = scalar_lea.vmem %s0, %s208
        %s210 = smul.u32 8, %s23
        %s211 = smul.u32 %s23, 8
        %s212 = smul.u32 %s211, 24
        %s213 = scalar_lea.vmem %s209, %s212
        %v214 = vld [vmem:[%s213] sm:$0xff]
        %v215 = vld [vmem:[%s213 + $0x8] sm:$0xff]
        %v216 = vld [vmem:[%s213 + $0x10] sm:$0x3]
        %v217 = vld [vmem:[%s213 + $0x18] sm:$0xff]
        %v218 = vld [vmem:[%s213 + $0x20] sm:$0xff]
        %v219 = vld [vmem:[%s213 + $0x28] sm:$0x3]
        %v220 = vld [vmem:[%s213 + $0x30] sm:$0xff]
        %v221 = vld [vmem:[%s213 + $0x38] sm:$0xff]
        %v222 = vld [vmem:[%s213 + $0x40] sm:$0x3]
        %v223 = vld [vmem:[%s213 + $0x48] sm:$0xff]
        %v224 = vld [vmem:[%s213 + $0x50] sm:$0xff]
        %v225 = vld [vmem:[%s213 + $0x58] sm:$0x3]
        %v226 = vld [vmem:[%s213 + $0x60] sm:$0xff]
        %v227 = vld [vmem:[%s213 + $0x68] sm:$0xff]
        %v228 = vld [vmem:[%s213 + $0x70] sm:$0x3]
        %v229 = vld [vmem:[%s213 + $0x78] sm:$0xff]
        %v230 = vld [vmem:[%s213 + $0x80] sm:$0xff]
        %v231 = vld [vmem:[%s213 + $0x88] sm:$0x3]
        %v232 = vld [vmem:[%s213 + $0x90] sm:$0xff]
        %v233 = vld [vmem:[%s213 + $0x98] sm:$0xff]
        %v234 = vld [vmem:[%s213 + $0xa0] sm:$0x3]
        %v235 = vld [vmem:[%s213 + $0xa8] sm:$0xff]
        %v236 = vld [vmem:[%s213 + $0xb0] sm:$0xff]
        %v237 = vld [vmem:[%s213 + $0xb8] sm:$0x3]
        %v238 = vld [vmem:[%s213 + $0xc0] sm:$0xff]
        %v239 = vld [vmem:[%s213 + $0xc8] sm:$0xff]
        %v240 = vld [vmem:[%s213 + $0xd0] sm:$0x3]
        %v241 = vld [vmem:[%s213 + $0xd8] sm:$0xff]
        %v242 = vld [vmem:[%s213 + $0xe0] sm:$0xff]
        %v243 = vld [vmem:[%s213 + $0xe8] sm:$0x3]
        %v244 = vpack.c.bf16 %v215, %v214
        %v245 = vpack.c.bf16 %v218, %v217
        %v246 = vpack.c.bf16 %v221, %v220
        %v247 = vpack.c.bf16 %v224, %v223
        %v248 = vpack.c.bf16 %v227, %v226
        %v249 = vpack.c.bf16 %v230, %v229
        %v250 = vpack.c.bf16 %v233, %v232
        %v251 = vpack.c.bf16 %v236, %v235
        %v252 = vld [vmem:[%s1] sm:$0xf]
        %v253 = vld [vmem:[%s1 + $0x4] sm:$0xf]
        %v254 = vld [vmem:[%s1 + $0x8] sm:$0xf]
        %v255 = vld [vmem:[%s1 + $0xc] sm:$0xf]
        %v256 = vld [vmem:[%s1 + $0x10] sm:$0xf]
        %v257 = vld [vmem:[%s1 + $0x14] sm:$0xf]
        %v258 = vld [vmem:[%s1 + $0x18] sm:$0xf]
        %v259 = vld [vmem:[%s1 + $0x1c] sm:$0xf]
        %v260 = vld [vmem:[%s1 + $0x20] sm:$0xf]
        %v261 = vld [vmem:[%s1 + $0x24] sm:$0xf]
        %v262 = vld [vmem:[%s1 + $0x28] sm:$0xf]
        %v263 = vld [vmem:[%s1 + $0x2c] sm:$0xf]
        %v264 = vld [vmem:[%s1 + $0x30] sm:$0xf]
        %v265 = vld [vmem:[%s1 + $0x34] sm:$0xf]
        %v266 = vld [vmem:[%s1 + $0x38] sm:$0xf]
        %v267 = vld [vmem:[%s1 + $0x3c] sm:$0xf]
        %vm292 = vcmask 1046528
        %v293 = vrot.slane %v214, 1
        %v294 = vrot.slane %v215, 1
        %v295 = vsel %vm292, %v293, %v294
        %v296 = vrot.slane %v216, 1
        %v297 = vsel %vm292, %v294, %v296
        %v298 = vrot.slane %v217, 1
        %v299 = vrot.slane %v218, 1
        %v300 = vsel %vm292, %v298, %v299
        %v301 = vrot.slane %v219, 1
        %v302 = vsel %vm292, %v299, %v301
        %v303 = vrot.slane %v220, 1
        %v304 = vrot.slane %v221, 1
        %v305 = vsel %vm292, %v303, %v304
        %v306 = vrot.slane %v222, 1
        %v307 = vsel %vm292, %v304, %v306
        %v308 = vrot.slane %v223, 1
        %v309 = vrot.slane %v224, 1
        %v310 = vsel %vm292, %v308, %v309
        %v311 = vrot.slane %v225, 1
        %v312 = vsel %vm292, %v309, %v311
        %v313 = vrot.slane %v226, 1
        %v314 = vrot.slane %v227, 1
        %v315 = vsel %vm292, %v313, %v314
        %v316 = vrot.slane %v228, 1
        %v317 = vsel %vm292, %v314, %v316
        %v318 = vrot.slane %v229, 1
        %v319 = vrot.slane %v230, 1
        %v320 = vsel %vm292, %v318, %v319
        %v321 = vrot.slane %v231, 1
        %v322 = vsel %vm292, %v319, %v321
        %v323 = vrot.slane %v232, 1
        %v324 = vrot.slane %v233, 1
        %v325 = vsel %vm292, %v323, %v324
        %v326 = vrot.slane %v234, 1
        %v327 = vsel %vm292, %v324, %v326
        %v328 = vrot.slane %v235, 1
        %v329 = vrot.slane %v236, 1
        %v330 = vsel %vm292, %v328, %v329
        %v331 = vrot.slane %v237, 1
        %v332 = vsel %vm292, %v329, %v331
        %v349 = vpack.c.bf16 %v297, %v295
        %v350 = vpack.c.bf16 %v302, %v300
        %v351 = vpack.c.bf16 %v307, %v305
        %v352 = vpack.c.bf16 %v312, %v310
        %v353 = vpack.c.bf16 %v317, %v315
        %v354 = vpack.c.bf16 %v322, %v320
        %v355 = vpack.c.bf16 %v327, %v325
        %v356 = vpack.c.bf16 %v332, %v330
        %s357 = scalar_lea.vmem %s1, 64
        %v358 = vld [vmem:[%s357] sm:$0xf]
        %v359 = vld [vmem:[%s357 + $0x4] sm:$0xf]
        %v360 = vld [vmem:[%s357 + $0x8] sm:$0xf]
        %v361 = vld [vmem:[%s357 + $0xc] sm:$0xf]
        %v362 = vld [vmem:[%s357 + $0x10] sm:$0xf]
        %v363 = vld [vmem:[%s357 + $0x14] sm:$0xf]
        %v364 = vld [vmem:[%s357 + $0x18] sm:$0xf]
        %v365 = vld [vmem:[%s357 + $0x1c] sm:$0xf]
        %v366 = vld [vmem:[%s357 + $0x20] sm:$0xf]
        %v367 = vld [vmem:[%s357 + $0x24] sm:$0xf]
        %v368 = vld [vmem:[%s357 + $0x28] sm:$0xf]
        %v369 = vld [vmem:[%s357 + $0x2c] sm:$0xf]
        %v370 = vld [vmem:[%s357 + $0x30] sm:$0xf]
        %v371 = vld [vmem:[%s357 + $0x34] sm:$0xf]
        %v372 = vld [vmem:[%s357 + $0x38] sm:$0xf]
        %v373 = vld [vmem:[%s357 + $0x3c] sm:$0xf]
        %v390 = vunpack.c.l.b16 %v358
        %v391 = vunpack.c.l.b16 %v359
        %v392 = vunpack.c.l.b16 %v360
        %v393 = vunpack.c.l.b16 %v361
        %v394 = vunpack.c.l.b16 %v362
        %v395 = vunpack.c.l.b16 %v363
        %v396 = vunpack.c.l.b16 %v364
        %v397 = vunpack.c.l.b16 %v365
        %v398 = vunpack.c.l.b16 %v366
        %v399 = vunpack.c.l.b16 %v367
        %v400 = vunpack.c.l.b16 %v368
        %v401 = vunpack.c.l.b16 %v369
        %v402 = vunpack.c.l.b16 %v370
        %v403 = vunpack.c.l.b16 %v371
        %v404 = vunpack.c.l.b16 %v372
        %v405 = vunpack.c.l.b16 %v373
        %v406 = vpack.c.b16 %v391, %v390
        %v407 = vpack.c.b16 %v393, %v392
        %v408 = vpack.c.b16 %v395, %v394
        %v409 = vpack.c.b16 %v397, %v396
        %v410 = vpack.c.b16 %v399, %v398
        %v411 = vpack.c.b16 %v401, %v400
        %v412 = vpack.c.b16 %v403, %v402
        %v413 = vpack.c.b16 %v405, %v404
        %422 = vmatpush.bf16.msra.mxu0 %v413
        %423 = vmatpush.bf16.msra.mxu0 %v412
        %424 = vmatpush.bf16.msra.mxu0 %v411
        %425 = vmatpush.bf16.msra.mxu0 %v410
        %426 = vmatpush.bf16.msra.mxu0 %v409
        %427 = vmatpush.bf16.msra.mxu0 %v408
        %428 = vmatpush.bf16.msra.mxu0 %v407
        %429 = vmatpush.bf16.msra.mxu0 %v406
        %430 = vmatmul.bf16.gmra.mxu0 %v349
        %v431 = vpop.f32.mrf.mxu0
        %v432 = vadd.f32 0.0, %v431
        %v433 = vpop.f32.mrf.mxu0
        %v434 = vadd.f32 0.0, %v433
        %435 = vmatmul.bf16.gmra.mxu0 %v350
        %v436 = vpop.f32.mrf.mxu0
        %v437 = vadd.f32 0.0, %v436
        %v438 = vpop.f32.mrf.mxu0
        %v439 = vadd.f32 0.0, %v438
        %440 = vmatmul.bf16.gmra.mxu0 %v351
        %v441 = vpop.f32.mrf.mxu0
        %v442 = vadd.f32 0.0, %v441
        %v443 = vpop.f32.mrf.mxu0
        %v444 = vadd.f32 0.0, %v443
        %445 = vmatmul.bf16.gmra.mxu0 %v352
        %v446 = vpop.f32.mrf.mxu0
        %v447 = vadd.f32 0.0, %v446
        %v448 = vpop.f32.mrf.mxu0
        %v449 = vadd.f32 0.0, %v448
        %450 = vmatmul.bf16.gmra.mxu0 %v353
        %v451 = vpop.f32.mrf.mxu0
        %v452 = vadd.f32 0.0, %v451
        %v453 = vpop.f32.mrf.mxu0
        %v454 = vadd.f32 0.0, %v453
        %455 = vmatmul.bf16.gmra.mxu0 %v354
        %v456 = vpop.f32.mrf.mxu0
        %v457 = vadd.f32 0.0, %v456
        %v458 = vpop.f32.mrf.mxu0
        %v459 = vadd.f32 0.0, %v458
        %460 = vmatmul.bf16.gmra.mxu0 %v355
        %v461 = vpop.f32.mrf.mxu0
        %v462 = vadd.f32 0.0, %v461
        %v463 = vpop.f32.mrf.mxu0
        %v464 = vadd.f32 0.0, %v463
        %465 = vmatmul.bf16.gmra.mxu0 %v356
        %v466 = vpop.f32.mrf.mxu0
        %v467 = vadd.f32 0.0, %v466
        %v468 = vpop.f32.mrf.mxu0
        %v469 = vadd.f32 0.0, %v468
        %470 = vdwg.mxu0
        %v487 = vunpack.c.l.b16 %v252
        %v488 = vunpack.c.l.b16 %v253
        %v489 = vunpack.c.l.b16 %v254
        %v490 = vunpack.c.l.b16 %v255
        %v491 = vunpack.c.l.b16 %v256
        %v492 = vunpack.c.l.b16 %v257
        %v493 = vunpack.c.l.b16 %v258
        %v494 = vunpack.c.l.b16 %v259
        %v495 = vunpack.c.l.b16 %v260
        %v496 = vunpack.c.l.b16 %v261
        %v497 = vunpack.c.l.b16 %v262
        %v498 = vunpack.c.l.b16 %v263
        %v499 = vunpack.c.l.b16 %v264
        %v500 = vunpack.c.l.b16 %v265
        %v501 = vunpack.c.l.b16 %v266
        %v502 = vunpack.c.l.b16 %v267
        %v503 = vpack.c.b16 %v488, %v487
        %v504 = vpack.c.b16 %v490, %v489
        %v505 = vpack.c.b16 %v492, %v491
        %v506 = vpack.c.b16 %v494, %v493
        %v507 = vpack.c.b16 %v496, %v495
        %v508 = vpack.c.b16 %v498, %v497
        %v509 = vpack.c.b16 %v500, %v499
        %v510 = vpack.c.b16 %v502, %v501
        %519 = vmatpush.bf16.msra.mxu0 %v510
        %520 = vmatpush.bf16.msra.mxu0 %v509
        %521 = vmatpush.bf16.msra.mxu0 %v508
        %522 = vmatpush.bf16.msra.mxu0 %v507
        %523 = vmatpush.bf16.msra.mxu0 %v506
        %524 = vmatpush.bf16.msra.mxu0 %v505
        %525 = vmatpush.bf16.msra.mxu0 %v504
        %526 = vmatpush.bf16.msra.mxu0 %v503
        %527 = vmatmul.bf16.gmra.mxu0 %v244
        %v528 = vpop.f32.mrf.mxu0
        %v529 = vadd.f32 %v432, %v528
        %v530 = vpop.f32.mrf.mxu0
        %v531 = vadd.f32 %v434, %v530
        %532 = vmatmul.bf16.gmra.mxu0 %v245
        %v533 = vpop.f32.mrf.mxu0
        %v534 = vadd.f32 %v437, %v533
        %v535 = vpop.f32.mrf.mxu0
        %v536 = vadd.f32 %v439, %v535
        %537 = vmatmul.bf16.gmra.mxu0 %v246
        %v538 = vpop.f32.mrf.mxu0
        %v539 = vadd.f32 %v442, %v538
        %v540 = vpop.f32.mrf.mxu0
        %v541 = vadd.f32 %v444, %v540
        %542 = vmatmul.bf16.gmra.mxu0 %v247
        %v543 = vpop.f32.mrf.mxu0
        %v544 = vadd.f32 %v447, %v543
        %v545 = vpop.f32.mrf.mxu0
        %v546 = vadd.f32 %v449, %v545
        %547 = vmatmul.bf16.gmra.mxu0 %v248
        %v548 = vpop.f32.mrf.mxu0
        %v549 = vadd.f32 %v452, %v548
        %v550 = vpop.f32.mrf.mxu0
        %v551 = vadd.f32 %v454, %v550
        %552 = vmatmul.bf16.gmra.mxu0 %v249
        %v553 = vpop.f32.mrf.mxu0
        %v554 = vadd.f32 %v457, %v553
        %v555 = vpop.f32.mrf.mxu0
        %v556 = vadd.f32 %v459, %v555
        %557 = vmatmul.bf16.gmra.mxu0 %v250
        %v558 = vpop.f32.mrf.mxu0
        %v559 = vadd.f32 %v462, %v558
        %v560 = vpop.f32.mrf.mxu0
        %v561 = vadd.f32 %v464, %v560
        %562 = vmatmul.bf16.gmra.mxu0 %v251
        %v563 = vpop.f32.mrf.mxu0
        %v564 = vadd.f32 %v467, %v563
        %v565 = vpop.f32.mrf.mxu0
        %v566 = vadd.f32 %v469, %v565
        %567 = vdwg.mxu0
        %vm568 = vcmask 1045504
        %v569 = vrot.slane %v214, 2
        %v570 = vrot.slane %v215, 2
        %v571 = vsel %vm568, %v569, %v570
        %v572 = vrot.slane %v216, 2
        %v573 = vsel %vm568, %v570, %v572
        %v574 = vrot.slane %v217, 2
        %v575 = vrot.slane %v218, 2
        %v576 = vsel %vm568, %v574, %v575
        %v577 = vrot.slane %v219, 2
        %v578 = vsel %vm568, %v575, %v577
        %v579 = vrot.slane %v220, 2
        %v580 = vrot.slane %v221, 2
        %v581 = vsel %vm568, %v579, %v580
        %v582 = vrot.slane %v222, 2
        %v583 = vsel %vm568, %v580, %v582
        %v584 = vrot.slane %v223, 2
        %v585 = vrot.slane %v224, 2
        %v586 = vsel %vm568, %v584, %v585
        %v587 = vrot.slane %v225, 2
        %v588 = vsel %vm568, %v585, %v587
        %v589 = vrot.slane %v226, 2
        %v590 = vrot.slane %v227, 2
        %v591 = vsel %vm568, %v589, %v590
        %v592 = vrot.slane %v228, 2
        %v593 = vsel %vm568, %v590, %v592
        %v594 = vrot.slane %v229, 2
        %v595 = vrot.slane %v230, 2
        %v596 = vsel %vm568, %v594, %v595
        %v597 = vrot.slane %v231, 2
        %v598 = vsel %vm568, %v595, %v597
        %v599 = vrot.slane %v232, 2
        %v600 = vrot.slane %v233, 2
        %v601 = vsel %vm568, %v599, %v600
        %v602 = vrot.slane %v234, 2
        %v603 = vsel %vm568, %v600, %v602
        %v604 = vrot.slane %v235, 2
        %v605 = vrot.slane %v236, 2
        %v606 = vsel %vm568, %v604, %v605
        %v607 = vrot.slane %v237, 2
        %v608 = vsel %vm568, %v605, %v607
        %v625 = vpack.c.bf16 %v573, %v571
        %v626 = vpack.c.bf16 %v578, %v576
        %v627 = vpack.c.bf16 %v583, %v581
        %v628 = vpack.c.bf16 %v588, %v586
        %v629 = vpack.c.bf16 %v593, %v591
        %v630 = vpack.c.bf16 %v598, %v596
        %v631 = vpack.c.bf16 %v603, %v601
        %v632 = vpack.c.bf16 %v608, %v606
        %s633 = scalar_lea.vmem %s1, 128
        %v634 = vld [vmem:[%s633] sm:$0xf]
        %v635 = vld [vmem:[%s633 + $0x4] sm:$0xf]
        %v636 = vld [vmem:[%s633 + $0x8] sm:$0xf]
        %v637 = vld [vmem:[%s633 + $0xc] sm:$0xf]
        %v638 = vld [vmem:[%s633 + $0x10] sm:$0xf]
        %v639 = vld [vmem:[%s633 + $0x14] sm:$0xf]
        %v640 = vld [vmem:[%s633 + $0x18] sm:$0xf]
        %v641 = vld [vmem:[%s633 + $0x1c] sm:$0xf]
        %v642 = vld [vmem:[%s633 + $0x20] sm:$0xf]
        %v643 = vld [vmem:[%s633 + $0x24] sm:$0xf]
        %v644 = vld [vmem:[%s633 + $0x28] sm:$0xf]
        %v645 = vld [vmem:[%s633 + $0x2c] sm:$0xf]
        %v646 = vld [vmem:[%s633 + $0x30] sm:$0xf]
        %v647 = vld [vmem:[%s633 + $0x34] sm:$0xf]
        %v648 = vld [vmem:[%s633 + $0x38] sm:$0xf]
        %v649 = vld [vmem:[%s633 + $0x3c] sm:$0xf]
        %v666 = vunpack.c.l.b16 %v634
        %v667 = vunpack.c.l.b16 %v635
        %v668 = vunpack.c.l.b16 %v636
        %v669 = vunpack.c.l.b16 %v637
        %v670 = vunpack.c.l.b16 %v638
        %v671 = vunpack.c.l.b16 %v639
        %v672 = vunpack.c.l.b16 %v640
        %v673 = vunpack.c.l.b16 %v641
        %v674 = vunpack.c.l.b16 %v642
        %v675 = vunpack.c.l.b16 %v643
        %v676 = vunpack.c.l.b16 %v644
        %v677 = vunpack.c.l.b16 %v645
        %v678 = vunpack.c.l.b16 %v646
        %v679 = vunpack.c.l.b16 %v647
        %v680 = vunpack.c.l.b16 %v648
        %v681 = vunpack.c.l.b16 %v649
        %v682 = vpack.c.b16 %v667, %v666
        %v683 = vpack.c.b16 %v669, %v668
        %v684 = vpack.c.b16 %v671, %v670
        %v685 = vpack.c.b16 %v673, %v672
        %v686 = vpack.c.b16 %v675, %v674
        %v687 = vpack.c.b16 %v677, %v676
        %v688 = vpack.c.b16 %v679, %v678
        %v689 = vpack.c.b16 %v681, %v680
        %698 = vmatpush.bf16.msra.mxu0 %v689
        %699 = vmatpush.bf16.msra.mxu0 %v688
        %700 = vmatpush.bf16.msra.mxu0 %v687
        %701 = vmatpush.bf16.msra.mxu0 %v686
        %702 = vmatpush.bf16.msra.mxu0 %v685
        %703 = vmatpush.bf16.msra.mxu0 %v684
        %704 = vmatpush.bf16.msra.mxu0 %v683
        %705 = vmatpush.bf16.msra.mxu0 %v682
        %706 = vmatmul.bf16.gmra.mxu0 %v625
        %v707 = vpop.f32.mrf.mxu0
        %v708 = vadd.f32 0.0, %v707
        %v709 = vpop.f32.mrf.mxu0
        %v710 = vadd.f32 0.0, %v709
        %711 = vmatmul.bf16.gmra.mxu0 %v626
        %v712 = vpop.f32.mrf.mxu0
        %v713 = vadd.f32 0.0, %v712
        %v714 = vpop.f32.mrf.mxu0
        %v715 = vadd.f32 0.0, %v714
        %716 = vmatmul.bf16.gmra.mxu0 %v627
        %v717 = vpop.f32.mrf.mxu0
        %v718 = vadd.f32 0.0, %v717
        %v719 = vpop.f32.mrf.mxu0
        %v720 = vadd.f32 0.0, %v719
        %721 = vmatmul.bf16.gmra.mxu0 %v628
        %v722 = vpop.f32.mrf.mxu0
        %v723 = vadd.f32 0.0, %v722
        %v724 = vpop.f32.mrf.mxu0
        %v725 = vadd.f32 0.0, %v724
        %726 = vmatmul.bf16.gmra.mxu0 %v629
        %v727 = vpop.f32.mrf.mxu0
        %v728 = vadd.f32 0.0, %v727
        %v729 = vpop.f32.mrf.mxu0
        %v730 = vadd.f32 0.0, %v729
        %731 = vmatmul.bf16.gmra.mxu0 %v630
        %v732 = vpop.f32.mrf.mxu0
        %v733 = vadd.f32 0.0, %v732
        %v734 = vpop.f32.mrf.mxu0
        %v735 = vadd.f32 0.0, %v734
        %736 = vmatmul.bf16.gmra.mxu0 %v631
        %v737 = vpop.f32.mrf.mxu0
        %v738 = vadd.f32 0.0, %v737
        %v739 = vpop.f32.mrf.mxu0
        %v740 = vadd.f32 0.0, %v739
        %741 = vmatmul.bf16.gmra.mxu0 %v632
        %v742 = vpop.f32.mrf.mxu0
        %v743 = vadd.f32 0.0, %v742
        %v744 = vpop.f32.mrf.mxu0
        %v745 = vadd.f32 0.0, %v744
        %746 = vdwg.mxu0
        %v747 = vadd.f32 %v529, %v708
        %v748 = vadd.f32 %v531, %v710
        %v749 = vadd.f32 %v534, %v713
        %v750 = vadd.f32 %v536, %v715
        %v751 = vadd.f32 %v539, %v718
        %v752 = vadd.f32 %v541, %v720
        %v753 = vadd.f32 %v544, %v723
        %v754 = vadd.f32 %v546, %v725
        %v755 = vadd.f32 %v549, %v728
        %v756 = vadd.f32 %v551, %v730
        %v757 = vadd.f32 %v554, %v733
        %v758 = vadd.f32 %v556, %v735
        %v759 = vadd.f32 %v559, %v738
        %v760 = vadd.f32 %v561, %v740
        %v761 = vadd.f32 %v564, %v743
        %v762 = vadd.f32 %v566, %v745
        %v763 = vpack.c.bf16 %v239, %v238
        %s764 = scalar_lea.vmem %s1, 192
        %v765 = vld [vmem:[%s764] sm:$0xf]
        %v766 = vld [vmem:[%s764 + $0x4] sm:$0xf]
        %v767 = vld [vmem:[%s764 + $0x8] sm:$0xf]
        %v768 = vld [vmem:[%s764 + $0xc] sm:$0xf]
        %v769 = vld [vmem:[%s764 + $0x10] sm:$0xf]
        %v770 = vld [vmem:[%s764 + $0x14] sm:$0xf]
        %v771 = vld [vmem:[%s764 + $0x18] sm:$0xf]
        %v772 = vld [vmem:[%s764 + $0x1c] sm:$0xf]
        %v773 = vld [vmem:[%s764 + $0x20] sm:$0xf]
        %v774 = vld [vmem:[%s764 + $0x24] sm:$0xf]
        %v775 = vld [vmem:[%s764 + $0x28] sm:$0xf]
        %v776 = vld [vmem:[%s764 + $0x2c] sm:$0xf]
        %v777 = vld [vmem:[%s764 + $0x30] sm:$0xf]
        %v778 = vld [vmem:[%s764 + $0x34] sm:$0xf]
        %v779 = vld [vmem:[%s764 + $0x38] sm:$0xf]
        %v780 = vld [vmem:[%s764 + $0x3c] sm:$0xf]
        %v797 = vunpack.c.l.b16 %v765
        %v798 = vunpack.c.l.b16 %v766
        %v799 = vunpack.c.l.b16 %v767
        %v800 = vunpack.c.l.b16 %v768
        %v801 = vunpack.c.l.b16 %v769
        %v802 = vunpack.c.l.b16 %v770
        %v803 = vunpack.c.l.b16 %v771
        %v804 = vunpack.c.l.b16 %v772
        %v805 = vunpack.c.l.b16 %v773
        %v806 = vunpack.c.l.b16 %v774
        %v807 = vunpack.c.l.b16 %v775
        %v808 = vunpack.c.l.b16 %v776
        %v809 = vunpack.c.l.b16 %v777
        %v810 = vunpack.c.l.b16 %v778
        %v811 = vunpack.c.l.b16 %v779
        %v812 = vunpack.c.l.b16 %v780
        %v813 = vpack.c.b16 %v798, %v797
        %v814 = vpack.c.b16 %v800, %v799
        %v815 = vpack.c.b16 %v802, %v801
        %v816 = vpack.c.b16 %v804, %v803
        %v817 = vpack.c.b16 %v806, %v805
        %v818 = vpack.c.b16 %v808, %v807
        %v819 = vpack.c.b16 %v810, %v809
        %v820 = vpack.c.b16 %v812, %v811
        %829 = vmatpush.bf16.msra.mxu0 %v820
        %830 = vmatpush.bf16.msra.mxu0 %v819
        %831 = vmatpush.bf16.msra.mxu0 %v818
        %832 = vmatpush.bf16.msra.mxu0 %v817
        %833 = vmatpush.bf16.msra.mxu0 %v816
        %834 = vmatpush.bf16.msra.mxu0 %v815
        %835 = vmatpush.bf16.msra.mxu0 %v814
        %836 = vmatpush.bf16.msra.mxu0 %v813
        %837 = vmatmul.bf16.gmra.mxu0 %v245
        %v838 = vpop.f32.mrf.mxu0
        %v839 = vadd.f32 0.0, %v838
        %v840 = vpop.f32.mrf.mxu0
        %v841 = vadd.f32 0.0, %v840
        %842 = vmatmul.bf16.gmra.mxu0 %v246
        %v843 = vpop.f32.mrf.mxu0
        %v844 = vadd.f32 0.0, %v843
        %v845 = vpop.f32.mrf.mxu0
        %v846 = vadd.f32 0.0, %v845
        %847 = vmatmul.bf16.gmra.mxu0 %v247
        %v848 = vpop.f32.mrf.mxu0
        %v849 = vadd.f32 0.0, %v848
        %v850 = vpop.f32.mrf.mxu0
        %v851 = vadd.f32 0.0, %v850
        %852 = vmatmul.bf16.gmra.mxu0 %v248
        %v853 = vpop.f32.mrf.mxu0
        %v854 = vadd.f32 0.0, %v853
        %v855 = vpop.f32.mrf.mxu0
        %v856 = vadd.f32 0.0, %v855
        %857 = vmatmul.bf16.gmra.mxu0 %v249
        %v858 = vpop.f32.mrf.mxu0
        %v859 = vadd.f32 0.0, %v858
        %v860 = vpop.f32.mrf.mxu0
        %v861 = vadd.f32 0.0, %v860
        %862 = vmatmul.bf16.gmra.mxu0 %v250
        %v863 = vpop.f32.mrf.mxu0
        %v864 = vadd.f32 0.0, %v863
        %v865 = vpop.f32.mrf.mxu0
        %v866 = vadd.f32 0.0, %v865
        %867 = vmatmul.bf16.gmra.mxu0 %v251
        %v868 = vpop.f32.mrf.mxu0
        %v869 = vadd.f32 0.0, %v868
        %v870 = vpop.f32.mrf.mxu0
        %v871 = vadd.f32 0.0, %v870
        %872 = vmatmul.bf16.gmra.mxu0 %v763
        %v873 = vpop.f32.mrf.mxu0
        %v874 = vadd.f32 0.0, %v873
        %v875 = vpop.f32.mrf.mxu0
        %v876 = vadd.f32 0.0, %v875
        %877 = vdwg.mxu0
        %v878 = vadd.f32 %v747, %v839
        %v879 = vadd.f32 %v748, %v841
        %v880 = vadd.f32 %v749, %v844
        %v881 = vadd.f32 %v750, %v846
        %v882 = vadd.f32 %v751, %v849
        %v883 = vadd.f32 %v752, %v851
        %v884 = vadd.f32 %v753, %v854
        %v885 = vadd.f32 %v754, %v856
        %v886 = vadd.f32 %v755, %v859
        %v887 = vadd.f32 %v756, %v861
        %v888 = vadd.f32 %v757, %v864
        %v889 = vadd.f32 %v758, %v866
        %v890 = vadd.f32 %v759, %v869
        %v891 = vadd.f32 %v760, %v871
        %v892 = vadd.f32 %v761, %v874
        %v893 = vadd.f32 %v762, %v876
        %v897 = vrot.slane %v238, 1
        %v898 = vrot.slane %v239, 1
        %v899 = vsel %vm292, %v897, %v898
        %v900 = vrot.slane %v240, 1
        %v901 = vsel %vm292, %v898, %v900
        %v904 = vpack.c.bf16 %v901, %v899
        %s905 = scalar_lea.vmem %s1, 256
        %v906 = vld [vmem:[%s905] sm:$0xf]
        %v907 = vld [vmem:[%s905 + $0x4] sm:$0xf]
        %v908 = vld [vmem:[%s905 + $0x8] sm:$0xf]
        %v909 = vld [vmem:[%s905 + $0xc] sm:$0xf]
        %v910 = vld [vmem:[%s905 + $0x10] sm:$0xf]
        %v911 = vld [vmem:[%s905 + $0x14] sm:$0xf]
        %v912 = vld [vmem:[%s905 + $0x18] sm:$0xf]
        %v913 = vld [vmem:[%s905 + $0x1c] sm:$0xf]
        %v914 = vld [vmem:[%s905 + $0x20] sm:$0xf]
        %v915 = vld [vmem:[%s905 + $0x24] sm:$0xf]
        %v916 = vld [vmem:[%s905 + $0x28] sm:$0xf]
        %v917 = vld [vmem:[%s905 + $0x2c] sm:$0xf]
        %v918 = vld [vmem:[%s905 + $0x30] sm:$0xf]
        %v919 = vld [vmem:[%s905 + $0x34] sm:$0xf]
        %v920 = vld [vmem:[%s905 + $0x38] sm:$0xf]
        %v921 = vld [vmem:[%s905 + $0x3c] sm:$0xf]
        %v938 = vunpack.c.l.b16 %v906
        %v939 = vunpack.c.l.b16 %v907
        %v940 = vunpack.c.l.b16 %v908
        %v941 = vunpack.c.l.b16 %v909
        %v942 = vunpack.c.l.b16 %v910
        %v943 = vunpack.c.l.b16 %v911
        %v944 = vunpack.c.l.b16 %v912
        %v945 = vunpack.c.l.b16 %v913
        %v946 = vunpack.c.l.b16 %v914
        %v947 = vunpack.c.l.b16 %v915
        %v948 = vunpack.c.l.b16 %v916
        %v949 = vunpack.c.l.b16 %v917
        %v950 = vunpack.c.l.b16 %v918
        %v951 = vunpack.c.l.b16 %v919
        %v952 = vunpack.c.l.b16 %v920
        %v953 = vunpack.c.l.b16 %v921
        %v954 = vpack.c.b16 %v939, %v938
        %v955 = vpack.c.b16 %v941, %v940
        %v956 = vpack.c.b16 %v943, %v942
        %v957 = vpack.c.b16 %v945, %v944
        %v958 = vpack.c.b16 %v947, %v946
        %v959 = vpack.c.b16 %v949, %v948
        %v960 = vpack.c.b16 %v951, %v950
        %v961 = vpack.c.b16 %v953, %v952
        %970 = vmatpush.bf16.msra.mxu0 %v961
        %971 = vmatpush.bf16.msra.mxu0 %v960
        %972 = vmatpush.bf16.msra.mxu0 %v959
        %973 = vmatpush.bf16.msra.mxu0 %v958
        %974 = vmatpush.bf16.msra.mxu0 %v957
        %975 = vmatpush.bf16.msra.mxu0 %v956
        %976 = vmatpush.bf16.msra.mxu0 %v955
        %977 = vmatpush.bf16.msra.mxu0 %v954
        %978 = vmatmul.bf16.gmra.mxu0 %v350
        %v979 = vpop.f32.mrf.mxu0
        %v980 = vadd.f32 0.0, %v979
        %v981 = vpop.f32.mrf.mxu0
        %v982 = vadd.f32 0.0, %v981
        %983 = vmatmul.bf16.gmra.mxu0 %v351
        %v984 = vpop.f32.mrf.mxu0
        %v985 = vadd.f32 0.0, %v984
        %v986 = vpop.f32.mrf.mxu0
        %v987 = vadd.f32 0.0, %v986
        %988 = vmatmul.bf16.gmra.mxu0 %v352
        %v989 = vpop.f32.mrf.mxu0
        %v990 = vadd.f32 0.0, %v989
        %v991 = vpop.f32.mrf.mxu0
        %v992 = vadd.f32 0.0, %v991
        %993 = vmatmul.bf16.gmra.mxu0 %v353
        %v994 = vpop.f32.mrf.mxu0
        %v995 = vadd.f32 0.0, %v994
        %v996 = vpop.f32.mrf.mxu0
        %v997 = vadd.f32 0.0, %v996
        %998 = vmatmul.bf16.gmra.mxu0 %v354
        %v999 = vpop.f32.mrf.mxu0
        %v1000 = vadd.f32 0.0, %v999
        %v1001 = vpop.f32.mrf.mxu0
        %v1002 = vadd.f32 0.0, %v1001
        %1003 = vmatmul.bf16.gmra.mxu0 %v355
        %v1004 = vpop.f32.mrf.mxu0
        %v1005 = vadd.f32 0.0, %v1004
        %v1006 = vpop.f32.mrf.mxu0
        %v1007 = vadd.f32 0.0, %v1006
        %1008 = vmatmul.bf16.gmra.mxu0 %v356
        %v1009 = vpop.f32.mrf.mxu0
        %v1010 = vadd.f32 0.0, %v1009
        %v1011 = vpop.f32.mrf.mxu0
        %v1012 = vadd.f32 0.0, %v1011
        %1013 = vmatmul.bf16.gmra.mxu0 %v904
        %v1014 = vpop.f32.mrf.mxu0
        %v1015 = vadd.f32 0.0, %v1014
        %v1016 = vpop.f32.mrf.mxu0
        %v1017 = vadd.f32 0.0, %v1016
        %1018 = vdwg.mxu0
        %v1019 = vadd.f32 %v878, %v980
        %v1020 = vadd.f32 %v879, %v982
        %v1021 = vadd.f32 %v880, %v985
        %v1022 = vadd.f32 %v881, %v987
        %v1023 = vadd.f32 %v882, %v990
        %v1024 = vadd.f32 %v883, %v992
        %v1025 = vadd.f32 %v884, %v995
        %v1026 = vadd.f32 %v885, %v997
        %v1027 = vadd.f32 %v886, %v1000
        %v1028 = vadd.f32 %v887, %v1002
        %v1029 = vadd.f32 %v888, %v1005
        %v1030 = vadd.f32 %v889, %v1007
        %v1031 = vadd.f32 %v890, %v1010
        %v1032 = vadd.f32 %v891, %v1012
        %v1033 = vadd.f32 %v892, %v1015
        %v1034 = vadd.f32 %v893, %v1017
        %v1035 = vrot.slane %v238, 2
        %v1036 = vrot.slane %v239, 2
        %v1037 = vsel %vm568, %v1035, %v1036
        %v1038 = vrot.slane %v240, 2
        %v1039 = vsel %vm568, %v1036, %v1038
        %v1042 = vpack.c.bf16 %v1039, %v1037
        %s1043 = scalar_lea.vmem %s1, 320
        %v1044 = vld [vmem:[%s1043] sm:$0xf]
        %v1045 = vld [vmem:[%s1043 + $0x4] sm:$0xf]
        %v1046 = vld [vmem:[%s1043 + $0x8] sm:$0xf]
        %v1047 = vld [vmem:[%s1043 + $0xc] sm:$0xf]
        %v1048 = vld [vmem:[%s1043 + $0x10] sm:$0xf]
        %v1049 = vld [vmem:[%s1043 + $0x14] sm:$0xf]
        %v1050 = vld [vmem:[%s1043 + $0x18] sm:$0xf]
        %v1051 = vld [vmem:[%s1043 + $0x1c] sm:$0xf]
        %v1052 = vld [vmem:[%s1043 + $0x20] sm:$0xf]
        %v1053 = vld [vmem:[%s1043 + $0x24] sm:$0xf]
        %v1054 = vld [vmem:[%s1043 + $0x28] sm:$0xf]
        %v1055 = vld [vmem:[%s1043 + $0x2c] sm:$0xf]
        %v1056 = vld [vmem:[%s1043 + $0x30] sm:$0xf]
        %v1057 = vld [vmem:[%s1043 + $0x34] sm:$0xf]
        %v1058 = vld [vmem:[%s1043 + $0x38] sm:$0xf]
        %v1059 = vld [vmem:[%s1043 + $0x3c] sm:$0xf]
        %v1076 = vunpack.c.l.b16 %v1044
        %v1077 = vunpack.c.l.b16 %v1045
        %v1078 = vunpack.c.l.b16 %v1046
        %v1079 = vunpack.c.l.b16 %v1047
        %v1080 = vunpack.c.l.b16 %v1048
        %v1081 = vunpack.c.l.b16 %v1049
        %v1082 = vunpack.c.l.b16 %v1050
        %v1083 = vunpack.c.l.b16 %v1051
        %v1084 = vunpack.c.l.b16 %v1052
        %v1085 = vunpack.c.l.b16 %v1053
        %v1086 = vunpack.c.l.b16 %v1054
        %v1087 = vunpack.c.l.b16 %v1055
        %v1088 = vunpack.c.l.b16 %v1056
        %v1089 = vunpack.c.l.b16 %v1057
        %v1090 = vunpack.c.l.b16 %v1058
        %v1091 = vunpack.c.l.b16 %v1059
        %v1092 = vpack.c.b16 %v1077, %v1076
        %v1093 = vpack.c.b16 %v1079, %v1078
        %v1094 = vpack.c.b16 %v1081, %v1080
        %v1095 = vpack.c.b16 %v1083, %v1082
        %v1096 = vpack.c.b16 %v1085, %v1084
        %v1097 = vpack.c.b16 %v1087, %v1086
        %v1098 = vpack.c.b16 %v1089, %v1088
        %v1099 = vpack.c.b16 %v1091, %v1090
        %1108 = vmatpush.bf16.msra.mxu0 %v1099
        %1109 = vmatpush.bf16.msra.mxu0 %v1098
        %1110 = vmatpush.bf16.msra.mxu0 %v1097
        %1111 = vmatpush.bf16.msra.mxu0 %v1096
        %1112 = vmatpush.bf16.msra.mxu0 %v1095
        %1113 = vmatpush.bf16.msra.mxu0 %v1094
        %1114 = vmatpush.bf16.msra.mxu0 %v1093
        %1115 = vmatpush.bf16.msra.mxu0 %v1092
        %1116 = vmatmul.bf16.gmra.mxu0 %v626
        %v1117 = vpop.f32.mrf.mxu0
        %v1118 = vadd.f32 0.0, %v1117
        %v1119 = vpop.f32.mrf.mxu0
        %v1120 = vadd.f32 0.0, %v1119
        %1121 = vmatmul.bf16.gmra.mxu0 %v627
        %v1122 = vpop.f32.mrf.mxu0
        %v1123 = vadd.f32 0.0, %v1122
        %v1124 = vpop.f32.mrf.mxu0
        %v1125 = vadd.f32 0.0, %v1124
        %1126 = vmatmul.bf16.gmra.mxu0 %v628
        %v1127 = vpop.f32.mrf.mxu0
        %v1128 = vadd.f32 0.0, %v1127
        %v1129 = vpop.f32.mrf.mxu0
        %v1130 = vadd.f32 0.0, %v1129
        %1131 = vmatmul.bf16.gmra.mxu0 %v629
        %v1132 = vpop.f32.mrf.mxu0
        %v1133 = vadd.f32 0.0, %v1132
        %v1134 = vpop.f32.mrf.mxu0
        %v1135 = vadd.f32 0.0, %v1134
        %1136 = vmatmul.bf16.gmra.mxu0 %v630
        %v1137 = vpop.f32.mrf.mxu0
        %v1138 = vadd.f32 0.0, %v1137
        %v1139 = vpop.f32.mrf.mxu0
        %v1140 = vadd.f32 0.0, %v1139
        %1141 = vmatmul.bf16.gmra.mxu0 %v631
        %v1142 = vpop.f32.mrf.mxu0
        %v1143 = vadd.f32 0.0, %v1142
        %v1144 = vpop.f32.mrf.mxu0
        %v1145 = vadd.f32 0.0, %v1144
        %1146 = vmatmul.bf16.gmra.mxu0 %v632
        %v1147 = vpop.f32.mrf.mxu0
        %v1148 = vadd.f32 0.0, %v1147
        %v1149 = vpop.f32.mrf.mxu0
        %v1150 = vadd.f32 0.0, %v1149
        %1151 = vmatmul.bf16.gmra.mxu0 %v1042
        %v1152 = vpop.f32.mrf.mxu0
        %v1153 = vadd.f32 0.0, %v1152
        %v1154 = vpop.f32.mrf.mxu0
        %v1155 = vadd.f32 0.0, %v1154
        %1156 = vdwg.mxu0
        %v1157 = vadd.f32 %v1019, %v1118
        %v1158 = vadd.f32 %v1020, %v1120
        %v1159 = vadd.f32 %v1021, %v1123
        %v1160 = vadd.f32 %v1022, %v1125
        %v1161 = vadd.f32 %v1023, %v1128
        %v1162 = vadd.f32 %v1024, %v1130
        %v1163 = vadd.f32 %v1025, %v1133
        %v1164 = vadd.f32 %v1026, %v1135
        %v1165 = vadd.f32 %v1027, %v1138
        %v1166 = vadd.f32 %v1028, %v1140
        %v1167 = vadd.f32 %v1029, %v1143
        %v1168 = vadd.f32 %v1030, %v1145
        %v1169 = vadd.f32 %v1031, %v1148
        %v1170 = vadd.f32 %v1032, %v1150
        %v1171 = vadd.f32 %v1033, %v1153
        %v1172 = vadd.f32 %v1034, %v1155
        %v1173 = vpack.c.bf16 %v242, %v241
        %s1174 = scalar_lea.vmem %s1, 384
        %v1175 = vld [vmem:[%s1174] sm:$0xf]
        %v1176 = vld [vmem:[%s1174 + $0x4] sm:$0xf]
        %v1177 = vld [vmem:[%s1174 + $0x8] sm:$0xf]
        %v1178 = vld [vmem:[%s1174 + $0xc] sm:$0xf]
        %v1179 = vld [vmem:[%s1174 + $0x10] sm:$0xf]
        %v1180 = vld [vmem:[%s1174 + $0x14] sm:$0xf]
        %v1181 = vld [vmem:[%s1174 + $0x18] sm:$0xf]
        %v1182 = vld [vmem:[%s1174 + $0x1c] sm:$0xf]
        %v1183 = vld [vmem:[%s1174 + $0x20] sm:$0xf]
        %v1184 = vld [vmem:[%s1174 + $0x24] sm:$0xf]
        %v1185 = vld [vmem:[%s1174 + $0x28] sm:$0xf]
        %v1186 = vld [vmem:[%s1174 + $0x2c] sm:$0xf]
        %v1187 = vld [vmem:[%s1174 + $0x30] sm:$0xf]
        %v1188 = vld [vmem:[%s1174 + $0x34] sm:$0xf]
        %v1189 = vld [vmem:[%s1174 + $0x38] sm:$0xf]
        %v1190 = vld [vmem:[%s1174 + $0x3c] sm:$0xf]
        %v1207 = vunpack.c.l.b16 %v1175
        %v1208 = vunpack.c.l.b16 %v1176
        %v1209 = vunpack.c.l.b16 %v1177
        %v1210 = vunpack.c.l.b16 %v1178
        %v1211 = vunpack.c.l.b16 %v1179
        %v1212 = vunpack.c.l.b16 %v1180
        %v1213 = vunpack.c.l.b16 %v1181
        %v1214 = vunpack.c.l.b16 %v1182
        %v1215 = vunpack.c.l.b16 %v1183
        %v1216 = vunpack.c.l.b16 %v1184
        %v1217 = vunpack.c.l.b16 %v1185
        %v1218 = vunpack.c.l.b16 %v1186
        %v1219 = vunpack.c.l.b16 %v1187
        %v1220 = vunpack.c.l.b16 %v1188
        %v1221 = vunpack.c.l.b16 %v1189
        %v1222 = vunpack.c.l.b16 %v1190
        %v1223 = vpack.c.b16 %v1208, %v1207
        %v1224 = vpack.c.b16 %v1210, %v1209
        %v1225 = vpack.c.b16 %v1212, %v1211
        %v1226 = vpack.c.b16 %v1214, %v1213
        %v1227 = vpack.c.b16 %v1216, %v1215
        %v1228 = vpack.c.b16 %v1218, %v1217
        %v1229 = vpack.c.b16 %v1220, %v1219
        %v1230 = vpack.c.b16 %v1222, %v1221
        %1239 = vmatpush.bf16.msra.mxu0 %v1230
        %1240 = vmatpush.bf16.msra.mxu0 %v1229
        %1241 = vmatpush.bf16.msra.mxu0 %v1228
        %1242 = vmatpush.bf16.msra.mxu0 %v1227
        %1243 = vmatpush.bf16.msra.mxu0 %v1226
        %1244 = vmatpush.bf16.msra.mxu0 %v1225
        %1245 = vmatpush.bf16.msra.mxu0 %v1224
        %1246 = vmatpush.bf16.msra.mxu0 %v1223
        %1247 = vmatmul.bf16.gmra.mxu0 %v246
        %v1248 = vpop.f32.mrf.mxu0
        %v1249 = vadd.f32 0.0, %v1248
        %v1250 = vpop.f32.mrf.mxu0
        %v1251 = vadd.f32 0.0, %v1250
        %1252 = vmatmul.bf16.gmra.mxu0 %v247
        %v1253 = vpop.f32.mrf.mxu0
        %v1254 = vadd.f32 0.0, %v1253
        %v1255 = vpop.f32.mrf.mxu0
        %v1256 = vadd.f32 0.0, %v1255
        %1257 = vmatmul.bf16.gmra.mxu0 %v248
        %v1258 = vpop.f32.mrf.mxu0
        %v1259 = vadd.f32 0.0, %v1258
        %v1260 = vpop.f32.mrf.mxu0
        %v1261 = vadd.f32 0.0, %v1260
        %1262 = vmatmul.bf16.gmra.mxu0 %v249
        %v1263 = vpop.f32.mrf.mxu0
        %v1264 = vadd.f32 0.0, %v1263
        %v1265 = vpop.f32.mrf.mxu0
        %v1266 = vadd.f32 0.0, %v1265
        %1267 = vmatmul.bf16.gmra.mxu0 %v250
        %v1268 = vpop.f32.mrf.mxu0
        %v1269 = vadd.f32 0.0, %v1268
        %v1270 = vpop.f32.mrf.mxu0
        %v1271 = vadd.f32 0.0, %v1270
        %1272 = vmatmul.bf16.gmra.mxu0 %v251
        %v1273 = vpop.f32.mrf.mxu0
        %v1274 = vadd.f32 0.0, %v1273
        %v1275 = vpop.f32.mrf.mxu0
        %v1276 = vadd.f32 0.0, %v1275
        %1277 = vmatmul.bf16.gmra.mxu0 %v763
        %v1278 = vpop.f32.mrf.mxu0
        %v1279 = vadd.f32 0.0, %v1278
        %v1280 = vpop.f32.mrf.mxu0
        %v1281 = vadd.f32 0.0, %v1280
        %1282 = vmatmul.bf16.gmra.mxu0 %v1173
        %v1283 = vpop.f32.mrf.mxu0
        %v1284 = vadd.f32 0.0, %v1283
        %v1285 = vpop.f32.mrf.mxu0
        %v1286 = vadd.f32 0.0, %v1285
        %1287 = vdwg.mxu0
        %v1288 = vadd.f32 %v1157, %v1249
        %v1289 = vadd.f32 %v1158, %v1251
        %v1290 = vadd.f32 %v1159, %v1254
        %v1291 = vadd.f32 %v1160, %v1256
        %v1292 = vadd.f32 %v1161, %v1259
        %v1293 = vadd.f32 %v1162, %v1261
        %v1294 = vadd.f32 %v1163, %v1264
        %v1295 = vadd.f32 %v1164, %v1266
        %v1296 = vadd.f32 %v1165, %v1269
        %v1297 = vadd.f32 %v1166, %v1271
        %v1298 = vadd.f32 %v1167, %v1274
        %v1299 = vadd.f32 %v1168, %v1276
        %v1300 = vadd.f32 %v1169, %v1279
        %v1301 = vadd.f32 %v1170, %v1281
        %v1302 = vadd.f32 %v1171, %v1284
        %v1303 = vadd.f32 %v1172, %v1286
        %v1307 = vrot.slane %v241, 1
        %v1308 = vrot.slane %v242, 1
        %v1309 = vsel %vm292, %v1307, %v1308
        %v1310 = vrot.slane %v243, 1
        %v1311 = vsel %vm292, %v1308, %v1310
        %v1314 = vpack.c.bf16 %v1311, %v1309
        %s1315 = scalar_lea.vmem %s1, 448
        %v1316 = vld [vmem:[%s1315] sm:$0xf]
        %v1317 = vld [vmem:[%s1315 + $0x4] sm:$0xf]
        %v1318 = vld [vmem:[%s1315 + $0x8] sm:$0xf]
        %v1319 = vld [vmem:[%s1315 + $0xc] sm:$0xf]
        %v1320 = vld [vmem:[%s1315 + $0x10] sm:$0xf]
        %v1321 = vld [vmem:[%s1315 + $0x14] sm:$0xf]
        %v1322 = vld [vmem:[%s1315 + $0x18] sm:$0xf]
        %v1323 = vld [vmem:[%s1315 + $0x1c] sm:$0xf]
        %v1324 = vld [vmem:[%s1315 + $0x20] sm:$0xf]
        %v1325 = vld [vmem:[%s1315 + $0x24] sm:$0xf]
        %v1326 = vld [vmem:[%s1315 + $0x28] sm:$0xf]
        %v1327 = vld [vmem:[%s1315 + $0x2c] sm:$0xf]
        %v1328 = vld [vmem:[%s1315 + $0x30] sm:$0xf]
        %v1329 = vld [vmem:[%s1315 + $0x34] sm:$0xf]
        %v1330 = vld [vmem:[%s1315 + $0x38] sm:$0xf]
        %v1331 = vld [vmem:[%s1315 + $0x3c] sm:$0xf]
        %v1348 = vunpack.c.l.b16 %v1316
        %v1349 = vunpack.c.l.b16 %v1317
        %v1350 = vunpack.c.l.b16 %v1318
        %v1351 = vunpack.c.l.b16 %v1319
        %v1352 = vunpack.c.l.b16 %v1320
        %v1353 = vunpack.c.l.b16 %v1321
        %v1354 = vunpack.c.l.b16 %v1322
        %v1355 = vunpack.c.l.b16 %v1323
        %v1356 = vunpack.c.l.b16 %v1324
        %v1357 = vunpack.c.l.b16 %v1325
        %v1358 = vunpack.c.l.b16 %v1326
        %v1359 = vunpack.c.l.b16 %v1327
        %v1360 = vunpack.c.l.b16 %v1328
        %v1361 = vunpack.c.l.b16 %v1329
        %v1362 = vunpack.c.l.b16 %v1330
        %v1363 = vunpack.c.l.b16 %v1331
        %v1364 = vpack.c.b16 %v1349, %v1348
        %v1365 = vpack.c.b16 %v1351, %v1350
        %v1366 = vpack.c.b16 %v1353, %v1352
        %v1367 = vpack.c.b16 %v1355, %v1354
        %v1368 = vpack.c.b16 %v1357, %v1356
        %v1369 = vpack.c.b16 %v1359, %v1358
        %v1370 = vpack.c.b16 %v1361, %v1360
        %v1371 = vpack.c.b16 %v1363, %v1362
        %1380 = vmatpush.bf16.msra.mxu0 %v1371
        %1381 = vmatpush.bf16.msra.mxu0 %v1370
        %1382 = vmatpush.bf16.msra.mxu0 %v1369
        %1383 = vmatpush.bf16.msra.mxu0 %v1368
        %1384 = vmatpush.bf16.msra.mxu0 %v1367
        %1385 = vmatpush.bf16.msra.mxu0 %v1366
        %1386 = vmatpush.bf16.msra.mxu0 %v1365
        %1387 = vmatpush.bf16.msra.mxu0 %v1364
        %1388 = vmatmul.bf16.gmra.mxu0 %v351
        %v1389 = vpop.f32.mrf.mxu0
        %v1390 = vadd.f32 0.0, %v1389
        %v1391 = vpop.f32.mrf.mxu0
        %v1392 = vadd.f32 0.0, %v1391
        %1393 = vmatmul.bf16.gmra.mxu0 %v352
        %v1394 = vpop.f32.mrf.mxu0
        %v1395 = vadd.f32 0.0, %v1394
        %v1396 = vpop.f32.mrf.mxu0
        %v1397 = vadd.f32 0.0, %v1396
        %1398 = vmatmul.bf16.gmra.mxu0 %v353
        %v1399 = vpop.f32.mrf.mxu0
        %v1400 = vadd.f32 0.0, %v1399
        %v1401 = vpop.f32.mrf.mxu0
        %v1402 = vadd.f32 0.0, %v1401
        %1403 = vmatmul.bf16.gmra.mxu0 %v354
        %v1404 = vpop.f32.mrf.mxu0
        %v1405 = vadd.f32 0.0, %v1404
        %v1406 = vpop.f32.mrf.mxu0
        %v1407 = vadd.f32 0.0, %v1406
        %1408 = vmatmul.bf16.gmra.mxu0 %v355
        %v1409 = vpop.f32.mrf.mxu0
        %v1410 = vadd.f32 0.0, %v1409
        %v1411 = vpop.f32.mrf.mxu0
        %v1412 = vadd.f32 0.0, %v1411
        %1413 = vmatmul.bf16.gmra.mxu0 %v356
        %v1414 = vpop.f32.mrf.mxu0
        %v1415 = vadd.f32 0.0, %v1414
        %v1416 = vpop.f32.mrf.mxu0
        %v1417 = vadd.f32 0.0, %v1416
        %1418 = vmatmul.bf16.gmra.mxu0 %v904
        %v1419 = vpop.f32.mrf.mxu0
        %v1420 = vadd.f32 0.0, %v1419
        %v1421 = vpop.f32.mrf.mxu0
        %v1422 = vadd.f32 0.0, %v1421
        %1423 = vmatmul.bf16.gmra.mxu0 %v1314
        %v1424 = vpop.f32.mrf.mxu0
        %v1425 = vadd.f32 0.0, %v1424
        %v1426 = vpop.f32.mrf.mxu0
        %v1427 = vadd.f32 0.0, %v1426
        %1428 = vdwg.mxu0
        %v1429 = vadd.f32 %v1288, %v1390
        %v1430 = vadd.f32 %v1289, %v1392
        %v1431 = vadd.f32 %v1290, %v1395
        %v1432 = vadd.f32 %v1291, %v1397
        %v1433 = vadd.f32 %v1292, %v1400
        %v1434 = vadd.f32 %v1293, %v1402
        %v1435 = vadd.f32 %v1294, %v1405
        %v1436 = vadd.f32 %v1295, %v1407
        %v1437 = vadd.f32 %v1296, %v1410
        %v1438 = vadd.f32 %v1297, %v1412
        %v1439 = vadd.f32 %v1298, %v1415
        %v1440 = vadd.f32 %v1299, %v1417
        %v1441 = vadd.f32 %v1300, %v1420
        %v1442 = vadd.f32 %v1301, %v1422
        %v1443 = vadd.f32 %v1302, %v1425
        %v1444 = vadd.f32 %v1303, %v1427
        %v1445 = vrot.slane %v241, 2
        %v1446 = vrot.slane %v242, 2
        %v1447 = vsel %vm568, %v1445, %v1446
        %v1448 = vrot.slane %v243, 2
        %v1449 = vsel %vm568, %v1446, %v1448
        %v1452 = vpack.c.bf16 %v1449, %v1447
        %s1453 = scalar_lea.vmem %s1, 512
        %v1454 = vld [vmem:[%s1453] sm:$0xf]
        %v1455 = vld [vmem:[%s1453 + $0x4] sm:$0xf]
        %v1456 = vld [vmem:[%s1453 + $0x8] sm:$0xf]
        %v1457 = vld [vmem:[%s1453 + $0xc] sm:$0xf]
        %v1458 = vld [vmem:[%s1453 + $0x10] sm:$0xf]
        %v1459 = vld [vmem:[%s1453 + $0x14] sm:$0xf]
        %v1460 = vld [vmem:[%s1453 + $0x18] sm:$0xf]
        %v1461 = vld [vmem:[%s1453 + $0x1c] sm:$0xf]
        %v1462 = vld [vmem:[%s1453 + $0x20] sm:$0xf]
        %v1463 = vld [vmem:[%s1453 + $0x24] sm:$0xf]
        %v1464 = vld [vmem:[%s1453 + $0x28] sm:$0xf]
        %v1465 = vld [vmem:[%s1453 + $0x2c] sm:$0xf]
        %v1466 = vld [vmem:[%s1453 + $0x30] sm:$0xf]
        %v1467 = vld [vmem:[%s1453 + $0x34] sm:$0xf]
        %v1468 = vld [vmem:[%s1453 + $0x38] sm:$0xf]
        %v1469 = vld [vmem:[%s1453 + $0x3c] sm:$0xf]
        %v1486 = vunpack.c.l.b16 %v1454
        %v1487 = vunpack.c.l.b16 %v1455
        %v1488 = vunpack.c.l.b16 %v1456
        %v1489 = vunpack.c.l.b16 %v1457
        %v1490 = vunpack.c.l.b16 %v1458
        %v1491 = vunpack.c.l.b16 %v1459
        %v1492 = vunpack.c.l.b16 %v1460
        %v1493 = vunpack.c.l.b16 %v1461
        %v1494 = vunpack.c.l.b16 %v1462
        %v1495 = vunpack.c.l.b16 %v1463
        %v1496 = vunpack.c.l.b16 %v1464
        %v1497 = vunpack.c.l.b16 %v1465
        %v1498 = vunpack.c.l.b16 %v1466
        %v1499 = vunpack.c.l.b16 %v1467
        %v1500 = vunpack.c.l.b16 %v1468
        %v1501 = vunpack.c.l.b16 %v1469
        %v1502 = vpack.c.b16 %v1487, %v1486
        %v1503 = vpack.c.b16 %v1489, %v1488
        %v1504 = vpack.c.b16 %v1491, %v1490
        %v1505 = vpack.c.b16 %v1493, %v1492
        %v1506 = vpack.c.b16 %v1495, %v1494
        %v1507 = vpack.c.b16 %v1497, %v1496
        %v1508 = vpack.c.b16 %v1499, %v1498
        %v1509 = vpack.c.b16 %v1501, %v1500
        %1518 = vmatpush.bf16.msra.mxu0 %v1509
        %1519 = vmatpush.bf16.msra.mxu0 %v1508
        %1520 = vmatpush.bf16.msra.mxu0 %v1507
        %1521 = vmatpush.bf16.msra.mxu0 %v1506
        %1522 = vmatpush.bf16.msra.mxu0 %v1505
        %1523 = vmatpush.bf16.msra.mxu0 %v1504
        %1524 = vmatpush.bf16.msra.mxu0 %v1503
        %1525 = vmatpush.bf16.msra.mxu0 %v1502
        %1526 = vmatmul.bf16.gmra.mxu0 %v627
        %v1527 = vpop.f32.mrf.mxu0
        %v1528 = vadd.f32 0.0, %v1527
        %v1529 = vpop.f32.mrf.mxu0
        %v1530 = vadd.f32 0.0, %v1529
        %1531 = vmatmul.bf16.gmra.mxu0 %v628
        %v1532 = vpop.f32.mrf.mxu0
        %v1533 = vadd.f32 0.0, %v1532
        %v1534 = vpop.f32.mrf.mxu0
        %v1535 = vadd.f32 0.0, %v1534
        %1536 = vmatmul.bf16.gmra.mxu0 %v629
        %v1537 = vpop.f32.mrf.mxu0
        %v1538 = vadd.f32 0.0, %v1537
        %v1539 = vpop.f32.mrf.mxu0
        %v1540 = vadd.f32 0.0, %v1539
        %1541 = vmatmul.bf16.gmra.mxu0 %v630
        %v1542 = vpop.f32.mrf.mxu0
        %v1543 = vadd.f32 0.0, %v1542
        %v1544 = vpop.f32.mrf.mxu0
        %v1545 = vadd.f32 0.0, %v1544
        %1546 = vmatmul.bf16.gmra.mxu0 %v631
        %v1547 = vpop.f32.mrf.mxu0
        %v1548 = vadd.f32 0.0, %v1547
        %v1549 = vpop.f32.mrf.mxu0
        %v1550 = vadd.f32 0.0, %v1549
        %1551 = vmatmul.bf16.gmra.mxu0 %v632
        %v1552 = vpop.f32.mrf.mxu0
        %v1553 = vadd.f32 0.0, %v1552
        %v1554 = vpop.f32.mrf.mxu0
        %v1555 = vadd.f32 0.0, %v1554
        %1556 = vmatmul.bf16.gmra.mxu0 %v1042
        %v1557 = vpop.f32.mrf.mxu0
        %v1558 = vadd.f32 0.0, %v1557
        %v1559 = vpop.f32.mrf.mxu0
        %v1560 = vadd.f32 0.0, %v1559
        %1561 = vmatmul.bf16.gmra.mxu0 %v1452
        %v1562 = vpop.f32.mrf.mxu0
        %v1563 = vadd.f32 0.0, %v1562
        %v1564 = vpop.f32.mrf.mxu0
        %v1565 = vadd.f32 0.0, %v1564
        %1566 = vdwg.mxu0
        %v1567 = vadd.f32 %v1429, %v1528
        %v1568 = vadd.f32 %v1430, %v1530
        %v1569 = vadd.f32 %v1431, %v1533
        %v1570 = vadd.f32 %v1432, %v1535
        %v1571 = vadd.f32 %v1433, %v1538
        %v1572 = vadd.f32 %v1434, %v1540
        %v1573 = vadd.f32 %v1435, %v1543
        %v1574 = vadd.f32 %v1436, %v1545
        %v1575 = vadd.f32 %v1437, %v1548
        %v1576 = vadd.f32 %v1438, %v1550
        %v1577 = vadd.f32 %v1439, %v1553
        %v1578 = vadd.f32 %v1440, %v1555
        %v1579 = vadd.f32 %v1441, %v1558
        %v1580 = vadd.f32 %v1442, %v1560
        %v1581 = vadd.f32 %v1443, %v1563
        %v1582 = vadd.f32 %v1444, %v1565
        %v1583 = vld [vmem:[%s2] sm:$0x1]
        %v1585 = vperm.slane %v1583, 0
        %v1587 = vmul.f32 %v1567, %v1585
        %v1588 = vmul.f32 %v1568, %v1585
        %v1589 = vmul.f32 %v1569, %v1585
        %v1590 = vmul.f32 %v1570, %v1585
        %v1591 = vmul.f32 %v1571, %v1585
        %v1592 = vmul.f32 %v1572, %v1585
        %v1593 = vmul.f32 %v1573, %v1585
        %v1594 = vmul.f32 %v1574, %v1585
        %v1595 = vmul.f32 %v1575, %v1585
        %v1596 = vmul.f32 %v1576, %v1585
        %v1597 = vmul.f32 %v1577, %v1585
        %v1598 = vmul.f32 %v1578, %v1585
        %v1599 = vmul.f32 %v1579, %v1585
        %v1600 = vmul.f32 %v1580, %v1585
        %v1601 = vmul.f32 %v1581, %v1585
        %v1602 = vmul.f32 %v1582, %v1585
        %v1603 = vld [vmem:[%s3] sm:$0x1]
        %v1605 = vperm.slane %v1603, 0
        %v1607 = vadd.f32 %v1587, %v1605
        %v1608 = vadd.f32 %v1588, %v1605
        %v1609 = vadd.f32 %v1589, %v1605
        %v1610 = vadd.f32 %v1590, %v1605
        %v1611 = vadd.f32 %v1591, %v1605
        %v1612 = vadd.f32 %v1592, %v1605
        %v1613 = vadd.f32 %v1593, %v1605
        %v1614 = vadd.f32 %v1594, %v1605
        %v1615 = vadd.f32 %v1595, %v1605
        %v1616 = vadd.f32 %v1596, %v1605
        %v1617 = vadd.f32 %v1597, %v1605
        %v1618 = vadd.f32 %v1598, %v1605
        %v1619 = vadd.f32 %v1599, %v1605
        %v1620 = vadd.f32 %v1600, %v1605
        %v1621 = vadd.f32 %v1601, %v1605
        %v1622 = vadd.f32 %v1602, %v1605
        %vm1623 = vcmp.gt.f32.partialorder %v1607, 0.0
        %vm1624 = vcmp.gt.f32.partialorder %v1608, 0.0
        %vm1625 = vcmp.gt.f32.partialorder %v1609, 0.0
        %vm1626 = vcmp.gt.f32.partialorder %v1610, 0.0
        %vm1627 = vcmp.gt.f32.partialorder %v1611, 0.0
        %vm1628 = vcmp.gt.f32.partialorder %v1612, 0.0
        %vm1629 = vcmp.gt.f32.partialorder %v1613, 0.0
        %vm1630 = vcmp.gt.f32.partialorder %v1614, 0.0
        %vm1631 = vcmp.gt.f32.partialorder %v1615, 0.0
        %vm1632 = vcmp.gt.f32.partialorder %v1616, 0.0
        %vm1633 = vcmp.gt.f32.partialorder %v1617, 0.0
        %vm1634 = vcmp.gt.f32.partialorder %v1618, 0.0
        %vm1635 = vcmp.gt.f32.partialorder %v1619, 0.0
        %vm1636 = vcmp.gt.f32.partialorder %v1620, 0.0
        %vm1637 = vcmp.gt.f32.partialorder %v1621, 0.0
        %vm1638 = vcmp.gt.f32.partialorder %v1622, 0.0
        %v1639 = vmul.f32 %v1607, 0.1
        %v1640 = vmul.f32 %v1608, 0.1
        %v1641 = vmul.f32 %v1609, 0.1
        %v1642 = vmul.f32 %v1610, 0.1
        %v1643 = vmul.f32 %v1611, 0.1
        %v1644 = vmul.f32 %v1612, 0.1
        %v1645 = vmul.f32 %v1613, 0.1
        %v1646 = vmul.f32 %v1614, 0.1
        %v1647 = vmul.f32 %v1615, 0.1
        %v1648 = vmul.f32 %v1616, 0.1
        %v1649 = vmul.f32 %v1617, 0.1
        %v1650 = vmul.f32 %v1618, 0.1
        %v1651 = vmul.f32 %v1619, 0.1
        %v1652 = vmul.f32 %v1620, 0.1
        %v1653 = vmul.f32 %v1621, 0.1
        %v1654 = vmul.f32 %v1622, 0.1
        %v1655 = vsel %vm1623, %v1607, %v1639
        %v1656 = vsel %vm1624, %v1608, %v1640
        %v1657 = vsel %vm1625, %v1609, %v1641
        %v1658 = vsel %vm1626, %v1610, %v1642
        %v1659 = vsel %vm1627, %v1611, %v1643
        %v1660 = vsel %vm1628, %v1612, %v1644
        %v1661 = vsel %vm1629, %v1613, %v1645
        %v1662 = vsel %vm1630, %v1614, %v1646
        %v1663 = vsel %vm1631, %v1615, %v1647
        %v1664 = vsel %vm1632, %v1616, %v1648
        %v1665 = vsel %vm1633, %v1617, %v1649
        %v1666 = vsel %vm1634, %v1618, %v1650
        %v1667 = vsel %vm1635, %v1619, %v1651
        %v1668 = vsel %vm1636, %v1620, %v1652
        %v1669 = vsel %vm1637, %v1621, %v1653
        %v1670 = vsel %vm1638, %v1622, %v1654
        %1671 = vst [vmem:[%s204] sm:$0xff] %v1655
        %1672 = vst [vmem:[%s204 + $0x8] sm:$0xff] %v1656
        %1673 = vst [vmem:[%s204 + $0x10] sm:$0xff] %v1657
        %1674 = vst [vmem:[%s204 + $0x18] sm:$0xff] %v1658
        %1675 = vst [vmem:[%s204 + $0x20] sm:$0xff] %v1659
        %1676 = vst [vmem:[%s204 + $0x28] sm:$0xff] %v1660
        %1677 = vst [vmem:[%s204 + $0x30] sm:$0xff] %v1661
        %1678 = vst [vmem:[%s204 + $0x38] sm:$0xff] %v1662
        %1679 = vst [vmem:[%s204 + $0x40] sm:$0xff] %v1663
        %1680 = vst [vmem:[%s204 + $0x48] sm:$0xff] %v1664
        %1681 = vst [vmem:[%s204 + $0x50] sm:$0xff] %v1665
        %1682 = vst [vmem:[%s204 + $0x58] sm:$0xff] %v1666
        %1683 = vst [vmem:[%s204 + $0x60] sm:$0xff] %v1667
        %1684 = vst [vmem:[%s204 + $0x68] sm:$0xff] %v1668
        %1685 = vst [vmem:[%s204 + $0x70] sm:$0xff] %v1669
        %1686 = vst [vmem:[%s204 + $0x78] sm:$0xff] %v1670
        %s1687 = sand.u32 %s129, 1
        %s1688 = scalar_lea.sflag [#allocation3], %s1687
        %s1689 = sand.u32 %s129, 1
        %s1690 = smul.addr %s1689, 128
        %s1691 = scalar_lea.vmem [#allocation2], %s1690
        // Predicated region
        $region37: #{tpu_custom_call.1} parent=35 // pred_check
          %p1692 = pneg %p139
        $region38: #{tpu_custom_call.1} parent=35 // pred_check_branch
          %1694 = sbr.rel (%p1692) target = $region40
        $region39: #{tpu_custom_call.1} parent=35 // pred_region
          %s1695 = smul.u32 8, %s23
          %1697 = vsyncadd %s1688, 0
          %s1698 = smul.addr %s1695, 2
          %s1699 = smul.addr %s22, 32
          %s1700 = sadd.s32 %s1698, %s1699
          %s1701 = smul.addr %s1700, 8
          %s1702 = scalar_lea.hbm %s4, %s1701
          %s1703 = sshll.u32 %s1691, 4
          %s1704 = int_to_ptr.vmem [resolvable:$true] %s1703
          %s1705 = sshll.u32 %s1702, 4
          %s1706 = int_to_ptr.hbm [resolvable:$true] %s1705
          %1711 = dma.vmem_to_hbm [thread:$0]  %s1704, 2048, %s1706, %s1688, 128, 128, 8
        $region40: #{tpu_custom_call.1} parent=35 // pred_fallthru
          _
      $region36: #{tpu_custom_call.1} parent=5 // pred_fallthru
        _
      %p1712 = scmp.le.s32.totalorder 2, %s13
      // Predicated region
      $region41: #{tpu_custom_call.1} parent=5 // pred_check
        %p1713 = pneg %p1712
      $region42: #{tpu_custom_call.1} parent=5 // pred_check_branch
        %1715 = sbr.rel (%p1713) target = $region44
      $region43: #{tpu_custom_call.1} parent=5 // pred_region
        %s1716 = ssub.s32 %s13, 2
        // Predicated region
        $region45: #{tpu_custom_call.1} parent=43 // pred_check
          %p1717 = pneg %p145
        $region46: #{tpu_custom_call.1} parent=43 // pred_check_branch
          %1719 = sbr.rel (%p1717) target = $region48
        $region47: #{tpu_custom_call.1} parent=43 // pred_region
          %s1720 = sand.u32 %s130, 1
          %s1721 = scalar_lea.sflag [#allocation3], %s1720
          %s1722 = sand.u32 %s130, 1
          %s1723 = smul.addr %s1722, 128
          %s1724 = scalar_lea.vmem [#allocation2], %s1723
          %1726 = dma.done %s1721, 2048
        $region48: #{tpu_custom_call.1} parent=43 // pred_fallthru
          _
      $region44: #{tpu_custom_call.1} parent=5 // pred_fallthru
        _
    $region6: #{tpu_custom_call.1} parent=1 // loop_footer
      %s17 = sadd.s32 1, %s13
    $region7: #{tpu_custom_call.1} parent=1 // loop_footer_branch
      %12 = sbr.rel target = $region3
    $region8: #{tpu_custom_call.1} parent=1 // loop_exit
      _
    %1727 = vsyncpa [#allocation3], 1
    %s1728 = scalar_lea.sflag [#allocation3], 1
    %1729 = vsyncpa %s1728, 1

</llo_original>
